<compile_context>
chip_gen: v7x
topology: tpu7x:2x2x1
jax: 0.10.0
libtpu: 0.0.40
codegen_flags: <defaults>
</compile_context>

<pallas_src>
import numpy as np
import jax
import jax.numpy as jnp
from jax import lax
from jax.experimental import pallas as pl
from jax.experimental.pallas import tpu as pltpu


def _make_kernel(T, B, H):
    """Build the fused forward kernel for static (T, B, H)."""

    def kernel(x_ref,                                   # (T*B, D) time-major, flattened
               t2vw_ref, t2vb_ref, t2vw0_ref, t2vb0_ref,  # SineActivation (t2v)
               l0wa_ref, l0wb_ref, l0b_ref,               # layer0 (split matmul)
               wih_ref, bi_ref,                           # fused GRU input weights / folded bias
               whh_ref, bhn_ref,                          # fused GRU hidden weights / b_hn
               w1_ref, b1_ref, g1_ref, be1_ref,           # layer1 + bn1
               w2_ref, b2_ref, g2_ref, be2_ref,           # layer2 + bn2
               w3_ref, b3_ref,                            # layer3
               out_ref,                                   # (B, out_dim)
               g_ref):                                    # VMEM scratch (T*B, 3H)

        def mm(a, b):
            return jnp.dot(a, b, preferred_element_type=jnp.float32)

        # ---- Phase 1: h-independent work, batched over all T*B rows --------
        x = x_ref[...]                                             # (T*B, D)
        v1 = jnp.sin(mm(x, t2vw_ref[...]) + t2vb_ref[...])         # (T*B, 15)
        v2 = mm(x, t2vw0_ref[...]) + t2vb0_ref[...]                # (T*B, 1)
        xe = mm(v1, l0wa_ref[...]) + mm(v2, l0wb_ref[...]) + l0b_ref[...]  # (T*B, D)
        # Input-gate projections for every time step in one matmul.
        g_ref[...] = mm(xe, wih_ref[...]) + bi_ref[...]            # (T*B, 3H)

        whh = whh_ref[...]                                         # (H, 3H)
        bhn = bhn_ref[...]                                         # (1, H)

        # ---- Phase 2: serial GRU recurrence (PyTorch gate order r, z, n) ---
        def step(t, h):
            g = g_ref[pl.ds(t * B, B), :]                          # (B, 3H)
            gh = mm(h, whh)                                        # (B, 3H)
            r = jax.nn.sigmoid(g[:, :H] + gh[:, :H])
            z = jax.nn.sigmoid(g[:, H:2 * H] + gh[:, H:2 * H])
            n = jnp.tanh(g[:, 2 * H:] + r * (gh[:, 2 * H:] + bhn))
            return (1.0 - z) * n + z * h

        h = lax.fori_loop(0, T, step, jnp.zeros((B, H), jnp.float32),
                          unroll=True)

        # ---- Phase 3: MLP head with training-mode BatchNorm ----------------
        def bn(y, gamma, beta):
            mu = jnp.mean(y, axis=0, keepdims=True)
            var = jnp.mean((y - mu) * (y - mu), axis=0, keepdims=True)
            return (y - mu) * lax.rsqrt(var + 1e-5) * gamma + beta

        y = mm(h, w1_ref[...]) + b1_ref[...]
        y = bn(y, g1_ref[...], be1_ref[...])
        y = mm(y, w2_ref[...]) + b2_ref[...]
        y = bn(y, g2_ref[...], be2_ref[...])
        out_ref[...] = mm(y, w3_ref[...]) + b3_ref[...]

    return kernel


def gru_model_forward(x, params):
    """x: (B, T, D) batch_first (or (B, D), unsqueezed to T=1 like PyTorch)."""
    if x.ndim < 3:
        x = x[:, None, :]
    B, T, D = x.shape
    # time-major then flatten: row block t*B : (t+1)*B is time step t.
    x_flat = jnp.transpose(x, (1, 0, 2)).reshape(T * B, D).astype(jnp.float32)

    H = params["w_hh"].shape[0]
    out_dim = params["w3"].shape[1]

    # Fold GRU biases: r/z get b_ih + b_hh, n keeps only b_in (b_hn is scaled
    # by r inside the cell so it must stay separate).
    b_gates = params["b_ih"] + jnp.concatenate(
        [params["b_hh"][:, :2 * H], jnp.zeros((1, H), jnp.float32)], axis=1)
    b_hn = params["b_hh"][:, 2 * H:]

    ordered = [
        params["t2v_w"], params["t2v_b"], params["t2v_w0"], params["t2v_b0"],
        params["l0_wa"], params["l0_wb"], params["l0_b"],
        params["w_ih"], b_gates,
        params["w_hh"], b_hn,
        params["w1"], params["b1"], params["g1"], params["be1"],
        params["w2"], params["b2"], params["g2"], params["be2"],
        params["w3"], params["b3"],
    ]

    # Single-invocation kernel: no grid, every operand is a whole-array VMEM
    # block (all operands are tiny), gate inputs live in a VMEM scratch.
    return pl.pallas_call(
        _make_kernel(T, B, H),
        out_shape=jax.ShapeDtypeStruct((B, out_dim), jnp.float32),
        scratch_shapes=[pltpu.VMEM((T * B, 3 * H), jnp.float32)],
    )(x_flat, *ordered)


def init_params(key, input_size, hidden_size, output_size):
    """Deterministic synthetic init matching the module's parameter shapes
    (GRU weights stored fused as (D,3H)/(H,3H), gate order r,z,n)."""
    D, H = input_size, hidden_size
    ks = jax.random.split(key, 16)

    def u(k, shape, bound):
        return jax.random.uniform(k, shape, jnp.float32, -bound, bound)

    p = {}
    # SineActivation(in_features=D, out_features=16): torch.randn init.
    p["t2v_w"] = jax.random.normal(ks[0], (D, 15), jnp.float32)
    p["t2v_b"] = jax.random.normal(ks[1], (1, 15), jnp.float32)
    p["t2v_w0"] = jax.random.normal(ks[2], (D, 1), jnp.float32)
    p["t2v_b0"] = jax.random.normal(ks[3], (1, 1), jnp.float32)
    # layer0: Linear(16, D); weight stored transposed (16, D), split at row 15
    # (folds the cat([v1, v2]) @ W into v1 @ W[:15] + v2 @ W[15:]).
    w_l0 = u(ks[4], (16, D), 1.0 / np.sqrt(16))
    p["l0_wa"] = w_l0[:15, :]
    p["l0_wb"] = w_l0[15:16, :]
    p["l0_b"] = u(ks[5], (1, D), 1.0 / np.sqrt(16))
    # GRU(input_size=D, hidden_size=H): fused weights, gate order [r, z, n].
    bnd = 1.0 / np.sqrt(H)
    p["w_ih"] = u(ks[6], (D, 3 * H), bnd)
    p["w_hh"] = u(ks[7], (H, 3 * H), bnd)
    p["b_ih"] = u(ks[8], (1, 3 * H), bnd)
    p["b_hh"] = u(ks[9], (1, 3 * H), bnd)
    # Head: Linear(H,128) -> BN -> Linear(128,256) -> BN -> Linear(256,out).
    p["w1"] = u(ks[10], (H, 128), 1.0 / np.sqrt(H))
    p["b1"] = u(ks[11], (1, 128), 1.0 / np.sqrt(H))
    p["g1"] = jnp.ones((1, 128), jnp.float32)
    p["be1"] = jnp.zeros((1, 128), jnp.float32)
    p["w2"] = u(ks[12], (128, 256), 1.0 / np.sqrt(128))
    p["b2"] = u(ks[13], (1, 256), 1.0 / np.sqrt(128))
    p["g2"] = jnp.ones((1, 256), jnp.float32)
    p["be2"] = jnp.zeros((1, 256), jnp.float32)
    p["w3"] = u(ks[14], (256, output_size), 1.0 / np.sqrt(256))
    p["b3"] = u(ks[15], (1, output_size), 1.0 / np.sqrt(256))
    return p


def reference_forward(x, p):
    """Pure-JAX reference with the exact same math for verification."""
    if x.ndim < 3:
        x = x[:, None, :]
    B, T, D = x.shape
    H = p["w_hh"].shape[0]
    v1 = jnp.sin(x @ p["t2v_w"] + p["t2v_b"][0])
    v2 = x @ p["t2v_w0"] + p["t2v_b0"][0]
    xe = v1 @ p["l0_wa"] + v2 @ p["l0_wb"] + p["l0_b"][0]
    h = jnp.zeros((B, H), jnp.float32)
    for t in range(T):
        xt = xe[:, t, :]
        gi = xt @ p["w_ih"] + p["b_ih"]
        gh = h @ p["w_hh"] + p["b_hh"]
        r = jax.nn.sigmoid(gi[:, :H] + gh[:, :H])
        z = jax.nn.sigmoid(gi[:, H:2 * H] + gh[:, H:2 * H])
        n = jnp.tanh(gi[:, 2 * H:] + r * gh[:, 2 * H:])
        h = (1.0 - z) * n + z * h

    def bn(y, g, b):
        mu = jnp.mean(y, axis=0, keepdims=True)
        var = jnp.mean((y - mu) ** 2, axis=0, keepdims=True)
        return (y - mu) / jnp.sqrt(var + 1e-5) * g + b

    y = h @ p["w1"] + p["b1"]
    y = bn(y, p["g1"], p["be1"])
    y = y @ p["w2"] + p["b2"]
    y = bn(y, p["g2"], p["be2"])
    return y @ p["w3"] + p["b3"]


if __name__ == "__main__":
    B, T, D, H, OUT = 2, 8, 4, 32, 3
    key = jax.random.PRNGKey(0)
    kx, kp = jax.random.split(key)
    x = jax.random.normal(kx, (B, T, D), jnp.float32)
    params = init_params(kp, D, H, OUT)

    out = gru_model_forward(x, params)
    out = jax.block_until_ready(out)

    ref = reference_forward(x, params)
    np.testing.assert_allclose(np.asarray(out), np.asarray(ref), rtol=1e-2, atol=1e-2)
    print("KERNEL_OK")
</pallas_src>

<mosaic_0001>
module attributes {stable_mosaic.version = 11 : i64} {
  func.func @kernel(%arg0: memref<16x4xf32, #tpu.memory_space<vmem>>, %arg1: memref<4x15xf32, #tpu.memory_space<vmem>>, %arg2: memref<1x15xf32, #tpu.memory_space<vmem>>, %arg3: memref<4x1xf32, #tpu.memory_space<vmem>>, %arg4: memref<1x1xf32, #tpu.memory_space<vmem>>, %arg5: memref<15x4xf32, #tpu.memory_space<vmem>>, %arg6: memref<1x4xf32, #tpu.memory_space<vmem>>, %arg7: memref<1x4xf32, #tpu.memory_space<vmem>>, %arg8: memref<4x96xf32, #tpu.memory_space<vmem>>, %arg9: memref<1x96xf32, #tpu.memory_space<vmem>>, %arg10: memref<32x96xf32, #tpu.memory_space<vmem>>, %arg11: memref<1x32xf32, #tpu.memory_space<vmem>>, %arg12: memref<32x128xf32, #tpu.memory_space<vmem>>, %arg13: memref<1x128xf32, #tpu.memory_space<vmem>>, %arg14: memref<1x128xf32, #tpu.memory_space<vmem>>, %arg15: memref<1x128xf32, #tpu.memory_space<vmem>>, %arg16: memref<128x256xf32, #tpu.memory_space<vmem>>, %arg17: memref<1x256xf32, #tpu.memory_space<vmem>>, %arg18: memref<1x256xf32, #tpu.memory_space<vmem>>, %arg19: memref<1x256xf32, #tpu.memory_space<vmem>>, %arg20: memref<256x3xf32, #tpu.memory_space<vmem>>, %arg21: memref<1x3xf32, #tpu.memory_space<vmem>>, %arg22: memref<2x3xf32, #tpu.memory_space<vmem>>, %arg23: memref<16x96xf32, #tpu.memory_space<vmem>>) attributes {dimension_semantics = [], scalar_prefetch = 0 : i64, scratch_operands = 1 : i64, tpu.core_type = #tpu.core_type<tc>} {
    %c0 = arith.constant 0 : index
    %c0_0 = arith.constant 0 : index
    %0 = vector.load %arg0[%c0, %c0_0] : memref<16x4xf32, #tpu.memory_space<vmem>>, vector<16x4xf32>
    %c0_1 = arith.constant 0 : index
    %c0_2 = arith.constant 0 : index
    %1 = vector.load %arg1[%c0_1, %c0_2] : memref<4x15xf32, #tpu.memory_space<vmem>>, vector<4x15xf32>
    %cst = arith.constant dense<0.000000e+00> : vector<16x15xf32>
    %2 = tpu.matmul %0, %1, %cst {dimension_numbers = #tpu.dot_dimension_numbers<[1], [0], [0], [1], [0, 0, 1, 1], [], []>} : vector<16x4xf32>, vector<4x15xf32>, vector<16x15xf32> -> vector<16x15xf32>
    %c0_3 = arith.constant 0 : index
    %c0_4 = arith.constant 0 : index
    %3 = vector.load %arg2[%c0_3, %c0_4] : memref<1x15xf32, #tpu.memory_space<vmem>>, vector<1x15xf32>
    %4 = vector.broadcast %3 : vector<1x15xf32> to vector<16x15xf32>
    %5 = arith.addf %2, %4 : vector<16x15xf32>
    %6 = math.sin %5 : vector<16x15xf32>
    %c0_5 = arith.constant 0 : index
    %c0_6 = arith.constant 0 : index
    %7 = vector.load %arg3[%c0_5, %c0_6] : memref<4x1xf32, #tpu.memory_space<vmem>>, vector<4x1xf32>
    %cst_7 = arith.constant dense<0.000000e+00> : vector<16x1xf32>
    %8 = tpu.matmul %0, %7, %cst_7 {dimension_numbers = #tpu.dot_dimension_numbers<[1], [0], [0], [1], [0, 0, 1, 1], [], []>} : vector<16x4xf32>, vector<4x1xf32>, vector<16x1xf32> -> vector<16x1xf32>
    %c0_8 = arith.constant 0 : index
    %c0_9 = arith.constant 0 : index
    %9 = vector.load %arg4[%c0_8, %c0_9] : memref<1x1xf32, #tpu.memory_space<vmem>>, vector<1x1xf32>
    %10 = vector.broadcast %9 : vector<1x1xf32> to vector<16x1xf32>
    %11 = arith.addf %8, %10 : vector<16x1xf32>
    %c0_10 = arith.constant 0 : index
    %c0_11 = arith.constant 0 : index
    %12 = vector.load %arg5[%c0_10, %c0_11] : memref<15x4xf32, #tpu.memory_space<vmem>>, vector<15x4xf32>
    %cst_12 = arith.constant dense<0.000000e+00> : vector<16x4xf32>
    %13 = tpu.matmul %6, %12, %cst_12 {dimension_numbers = #tpu.dot_dimension_numbers<[1], [0], [0], [1], [0, 0, 1, 1], [], []>} : vector<16x15xf32>, vector<15x4xf32>, vector<16x4xf32> -> vector<16x4xf32>
    %c0_13 = arith.constant 0 : index
    %c0_14 = arith.constant 0 : index
    %14 = vector.load %arg6[%c0_13, %c0_14] : memref<1x4xf32, #tpu.memory_space<vmem>>, vector<1x4xf32>
    %cst_15 = arith.constant dense<0.000000e+00> : vector<16x4xf32>
    %15 = tpu.matmul %11, %14, %cst_15 {dimension_numbers = #tpu.dot_dimension_numbers<[1], [0], [0], [1], [0, 0, 1, 1], [], []>} : vector<16x1xf32>, vector<1x4xf32>, vector<16x4xf32> -> vector<16x4xf32>
    %16 = arith.addf %13, %15 : vector<16x4xf32>
    %c0_16 = arith.constant 0 : index
    %c0_17 = arith.constant 0 : index
    %17 = vector.load %arg7[%c0_16, %c0_17] : memref<1x4xf32, #tpu.memory_space<vmem>>, vector<1x4xf32>
    %18 = vector.broadcast %17 : vector<1x4xf32> to vector<16x4xf32>
    %19 = arith.addf %16, %18 : vector<16x4xf32>
    %c0_18 = arith.constant 0 : index
    %c0_19 = arith.constant 0 : index
    %20 = vector.load %arg8[%c0_18, %c0_19] : memref<4x96xf32, #tpu.memory_space<vmem>>, vector<4x96xf32>
    %cst_20 = arith.constant dense<0.000000e+00> : vector<16x96xf32>
    %21 = tpu.matmul %19, %20, %cst_20 {dimension_numbers = #tpu.dot_dimension_numbers<[1], [0], [0], [1], [0, 0, 1, 1], [], []>} : vector<16x4xf32>, vector<4x96xf32>, vector<16x96xf32> -> vector<16x96xf32>
    %c0_21 = arith.constant 0 : index
    %c0_22 = arith.constant 0 : index
    %22 = vector.load %arg9[%c0_21, %c0_22] : memref<1x96xf32, #tpu.memory_space<vmem>>, vector<1x96xf32>
    %23 = vector.broadcast %22 : vector<1x96xf32> to vector<16x96xf32>
    %24 = arith.addf %21, %23 : vector<16x96xf32>
    %c0_23 = arith.constant 0 : index
    %c0_24 = arith.constant 0 : index
    %25 = vector.load %arg23[%c0_23, %c0_24] : memref<16x96xf32, #tpu.memory_space<vmem>>, vector<16x96xf32>
    tpu.vector_store %arg23[%c0_23, %c0_24], %24 {strides = array<i32>} : memref<16x96xf32, #tpu.memory_space<vmem>>, vector<16x96xf32>,
    %c0_25 = arith.constant 0 : index
    %c0_26 = arith.constant 0 : index
    %26 = vector.load %arg10[%c0_25, %c0_26] : memref<32x96xf32, #tpu.memory_space<vmem>>, vector<32x96xf32>
    %c0_27 = arith.constant 0 : index
    %c0_28 = arith.constant 0 : index
    %27 = vector.load %arg11[%c0_27, %c0_28] : memref<1x32xf32, #tpu.memory_space<vmem>>, vector<1x32xf32>
    %cst_29 = arith.constant 0.000000e+00 : f32
    %28 = vector.broadcast %cst_29 : f32 to vector<2x32xf32>
    %c0_i32 = arith.constant 0 : i32
    %c2_i32 = arith.constant 2 : i32
    %29 = arith.muli %c0_i32, %c2_i32 : i32
    %30 = arith.index_cast %29 : i32 to index
    %c0_30 = arith.constant 0 : index
    %31 = vector.load %arg23[%30, %c0_30] : memref<16x96xf32, #tpu.memory_space<vmem>>, vector<2x96xf32>
    %cst_31 = arith.constant dense<0.000000e+00> : vector<2x96xf32>
    %32 = tpu.matmul %28, %26, %cst_31 {dimension_numbers = #tpu.dot_dimension_numbers<[1], [0], [0], [1], [0, 0, 1, 1], [], []>} : vector<2x32xf32>, vector<32x96xf32>, vector<2x96xf32> -> vector<2x96xf32>
    %33 = vector.extract_strided_slice %31 {offsets = [0, 0], sizes = [2, 32], strides = [1, 1]} : vector<2x96xf32> to vector<2x32xf32>
    %34 = vector.extract_strided_slice %32 {offsets = [0, 0], sizes = [2, 32], strides = [1, 1]} : vector<2x96xf32> to vector<2x32xf32>
    %35 = arith.addf %33, %34 : vector<2x32xf32>
    %36 = arith.negf %35 : vector<2x32xf32>
    %37 = math.exp %36 : vector<2x32xf32>
    %cst_32 = arith.constant 1.000000e+00 : f32
    %38 = vector.broadcast %cst_32 : f32 to vector<2x32xf32>
    %39 = arith.addf %38, %37 : vector<2x32xf32>
    %40 = arith.divf %38, %39 : vector<2x32xf32>
    %41 = vector.extract_strided_slice %31 {offsets = [0, 32], sizes = [2, 32], strides = [1, 1]} : vector<2x96xf32> to vector<2x32xf32>
    %42 = vector.extract_strided_slice %32 {offsets = [0, 32], sizes = [2, 32], strides = [1, 1]} : vector<2x96xf32> to vector<2x32xf32>
    %43 = arith.addf %41, %42 : vector<2x32xf32>
    %44 = arith.negf %43 : vector<2x32xf32>
    %45 = math.exp %44 : vector<2x32xf32>
    %cst_33 = arith.constant 1.000000e+00 : f32
    %46 = vector.broadcast %cst_33 : f32 to vector<2x32xf32>
    %47 = arith.addf %46, %45 : vector<2x32xf32>
    %48 = arith.divf %46, %47 : vector<2x32xf32>
    %49 = vector.extract_strided_slice %31 {offsets = [0, 64], sizes = [2, 32], strides = [1, 1]} : vector<2x96xf32> to vector<2x32xf32>
    %50 = vector.extract_strided_slice %32 {offsets = [0, 64], sizes = [2, 32], strides = [1, 1]} : vector<2x96xf32> to vector<2x32xf32>
    %51 = vector.broadcast %27 : vector<1x32xf32> to vector<2x32xf32>
    %52 = arith.addf %50, %51 : vector<2x32xf32>
    %53 = arith.mulf %40, %52 : vector<2x32xf32>
    %54 = arith.addf %49, %53 : vector<2x32xf32>
    %55 = math.tanh %54 : vector<2x32xf32>
    %cst_34 = arith.constant 1.000000e+00 : f32
    %56 = vector.broadcast %cst_34 : f32 to vector<2x32xf32>
    %57 = arith.subf %56, %48 : vector<2x32xf32>
    %58 = arith.mulf %57, %55 : vector<2x32xf32>
    %59 = arith.mulf %48, %28 : vector<2x32xf32>
    %60 = arith.addf %58, %59 : vector<2x32xf32>
    %c1_i32 = arith.constant 1 : i32
    %c2_i32_35 = arith.constant 2 : i32
    %61 = arith.muli %c1_i32, %c2_i32_35 : i32
    %62 = arith.index_cast %61 : i32 to index
    %c0_36 = arith.constant 0 : index
    %63 = vector.load %arg23[%62, %c0_36] : memref<16x96xf32, #tpu.memory_space<vmem>>, vector<2x96xf32>
    %cst_37 = arith.constant dense<0.000000e+00> : vector<2x96xf32>
    %64 = tpu.matmul %60, %26, %cst_37 {dimension_numbers = #tpu.dot_dimension_numbers<[1], [0], [0], [1], [0, 0, 1, 1], [], []>} : vector<2x32xf32>, vector<32x96xf32>, vector<2x96xf32> -> vector<2x96xf32>
    %65 = vector.extract_strided_slice %63 {offsets = [0, 0], sizes = [2, 32], strides = [1, 1]} : vector<2x96xf32> to vector<2x32xf32>
    %66 = vector.extract_strided_slice %64 {offsets = [0, 0], sizes = [2, 32], strides = [1, 1]} : vector<2x96xf32> to vector<2x32xf32>
    %67 = arith.addf %65, %66 : vector<2x32xf32>
    %68 = arith.negf %67 : vector<2x32xf32>
    %69 = math.exp %68 : vector<2x32xf32>
    %cst_38 = arith.constant 1.000000e+00 : f32
    %70 = vector.broadcast %cst_38 : f32 to vector<2x32xf32>
    %71 = arith.addf %70, %69 : vector<2x32xf32>
    %72 = arith.divf %70, %71 : vector<2x32xf32>
    %73 = vector.extract_strided_slice %63 {offsets = [0, 32], sizes = [2, 32], strides = [1, 1]} : vector<2x96xf32> to vector<2x32xf32>
    %74 = vector.extract_strided_slice %64 {offsets = [0, 32], sizes = [2, 32], strides = [1, 1]} : vector<2x96xf32> to vector<2x32xf32>
    %75 = arith.addf %73, %74 : vector<2x32xf32>
    %76 = arith.negf %75 : vector<2x32xf32>
    %77 = math.exp %76 : vector<2x32xf32>
    %cst_39 = arith.constant 1.000000e+00 : f32
    %78 = vector.broadcast %cst_39 : f32 to vector<2x32xf32>
    %79 = arith.addf %78, %77 : vector<2x32xf32>
    %80 = arith.divf %78, %79 : vector<2x32xf32>
    %81 = vector.extract_strided_slice %63 {offsets = [0, 64], sizes = [2, 32], strides = [1, 1]} : vector<2x96xf32> to vector<2x32xf32>
    %82 = vector.extract_strided_slice %64 {offsets = [0, 64], sizes = [2, 32], strides = [1, 1]} : vector<2x96xf32> to vector<2x32xf32>
    %83 = vector.broadcast %27 : vector<1x32xf32> to vector<2x32xf32>
    %84 = arith.addf %82, %83 : vector<2x32xf32>
    %85 = arith.mulf %72, %84 : vector<2x32xf32>
    %86 = arith.addf %81, %85 : vector<2x32xf32>
    %87 = math.tanh %86 : vector<2x32xf32>
    %cst_40 = arith.constant 1.000000e+00 : f32
    %88 = vector.broadcast %cst_40 : f32 to vector<2x32xf32>
    %89 = arith.subf %88, %80 : vector<2x32xf32>
    %90 = arith.mulf %89, %87 : vector<2x32xf32>
    %91 = arith.mulf %80, %60 : vector<2x32xf32>
    %92 = arith.addf %90, %91 : vector<2x32xf32>
    %c2_i32_41 = arith.constant 2 : i32
    %c2_i32_42 = arith.constant 2 : i32
    %93 = arith.muli %c2_i32_41, %c2_i32_42 : i32
    %94 = arith.index_cast %93 : i32 to index
    %c0_43 = arith.constant 0 : index
    %95 = vector.load %arg23[%94, %c0_43] : memref<16x96xf32, #tpu.memory_space<vmem>>, vector<2x96xf32>
    %cst_44 = arith.constant dense<0.000000e+00> : vector<2x96xf32>
    %96 = tpu.matmul %92, %26, %cst_44 {dimension_numbers = #tpu.dot_dimension_numbers<[1], [0], [0], [1], [0, 0, 1, 1], [], []>} : vector<2x32xf32>, vector<32x96xf32>, vector<2x96xf32> -> vector<2x96xf32>
    %97 = vector.extract_strided_slice %95 {offsets = [0, 0], sizes = [2, 32], strides = [1, 1]} : vector<2x96xf32> to vector<2x32xf32>
    %98 = vector.extract_strided_slice %96 {offsets = [0, 0], sizes = [2, 32], strides = [1, 1]} : vector<2x96xf32> to vector<2x32xf32>
    %99 = arith.addf %97, %98 : vector<2x32xf32>
    %100 = arith.negf %99 : vector<2x32xf32>
    %101 = math.exp %100 : vector<2x32xf32>
    %cst_45 = arith.constant 1.000000e+00 : f32
    %102 = vector.broadcast %cst_45 : f32 to vector<2x32xf32>
    %103 = arith.addf %102, %101 : vector<2x32xf32>
    %104 = arith.divf %102, %103 : vector<2x32xf32>
    %105 = vector.extract_strided_slice %95 {offsets = [0, 32], sizes = [2, 32], strides = [1, 1]} : vector<2x96xf32> to vector<2x32xf32>
    %106 = vector.extract_strided_slice %96 {offsets = [0, 32], sizes = [2, 32], strides = [1, 1]} : vector<2x96xf32> to vector<2x32xf32>
    %107 = arith.addf %105, %106 : vector<2x32xf32>
    %108 = arith.negf %107 : vector<2x32xf32>
    %109 = math.exp %108 : vector<2x32xf32>
    %cst_46 = arith.constant 1.000000e+00 : f32
    %110 = vector.broadcast %cst_46 : f32 to vector<2x32xf32>
    %111 = arith.addf %110, %109 : vector<2x32xf32>
    %112 = arith.divf %110, %111 : vector<2x32xf32>
    %113 = vector.extract_strided_slice %95 {offsets = [0, 64], sizes = [2, 32], strides = [1, 1]} : vector<2x96xf32> to vector<2x32xf32>
    %114 = vector.extract_strided_slice %96 {offsets = [0, 64], sizes = [2, 32], strides = [1, 1]} : vector<2x96xf32> to vector<2x32xf32>
    %115 = vector.broadcast %27 : vector<1x32xf32> to vector<2x32xf32>
    %116 = arith.addf %114, %115 : vector<2x32xf32>
    %117 = arith.mulf %104, %116 : vector<2x32xf32>
    %118 = arith.addf %113, %117 : vector<2x32xf32>
    %119 = math.tanh %118 : vector<2x32xf32>
    %cst_47 = arith.constant 1.000000e+00 : f32
    %120 = vector.broadcast %cst_47 : f32 to vector<2x32xf32>
    %121 = arith.subf %120, %112 : vector<2x32xf32>
    %122 = arith.mulf %121, %119 : vector<2x32xf32>
    %123 = arith.mulf %112, %92 : vector<2x32xf32>
    %124 = arith.addf %122, %123 : vector<2x32xf32>
    %c3_i32 = arith.constant 3 : i32
    %c2_i32_48 = arith.constant 2 : i32
    %125 = arith.muli %c3_i32, %c2_i32_48 : i32
    %126 = arith.index_cast %125 : i32 to index
    %c0_49 = arith.constant 0 : index
    %127 = vector.load %arg23[%126, %c0_49] : memref<16x96xf32, #tpu.memory_space<vmem>>, vector<2x96xf32>
    %cst_50 = arith.constant dense<0.000000e+00> : vector<2x96xf32>
    %128 = tpu.matmul %124, %26, %cst_50 {dimension_numbers = #tpu.dot_dimension_numbers<[1], [0], [0], [1], [0, 0, 1, 1], [], []>} : vector<2x32xf32>, vector<32x96xf32>, vector<2x96xf32> -> vector<2x96xf32>
    %129 = vector.extract_strided_slice %127 {offsets = [0, 0], sizes = [2, 32], strides = [1, 1]} : vector<2x96xf32> to vector<2x32xf32>
    %130 = vector.extract_strided_slice %128 {offsets = [0, 0], sizes = [2, 32], strides = [1, 1]} : vector<2x96xf32> to vector<2x32xf32>
    %131 = arith.addf %129, %130 : vector<2x32xf32>
    %132 = arith.negf %131 : vector<2x32xf32>
    %133 = math.exp %132 : vector<2x32xf32>
    %cst_51 = arith.constant 1.000000e+00 : f32
    %134 = vector.broadcast %cst_51 : f32 to vector<2x32xf32>
    %135 = arith.addf %134, %133 : vector<2x32xf32>
    %136 = arith.divf %134, %135 : vector<2x32xf32>
    %137 = vector.extract_strided_slice %127 {offsets = [0, 32], sizes = [2, 32], strides = [1, 1]} : vector<2x96xf32> to vector<2x32xf32>
    %138 = vector.extract_strided_slice %128 {offsets = [0, 32], sizes = [2, 32], strides = [1, 1]} : vector<2x96xf32> to vector<2x32xf32>
    %139 = arith.addf %137, %138 : vector<2x32xf32>
    %140 = arith.negf %139 : vector<2x32xf32>
    %141 = math.exp %140 : vector<2x32xf32>
    %cst_52 = arith.constant 1.000000e+00 : f32
    %142 = vector.broadcast %cst_52 : f32 to vector<2x32xf32>
    %143 = arith.addf %142, %141 : vector<2x32xf32>
    %144 = arith.divf %142, %143 : vector<2x32xf32>
    %145 = vector.extract_strided_slice %127 {offsets = [0, 64], sizes = [2, 32], strides = [1, 1]} : vector<2x96xf32> to vector<2x32xf32>
    %146 = vector.extract_strided_slice %128 {offsets = [0, 64], sizes = [2, 32], strides = [1, 1]} : vector<2x96xf32> to vector<2x32xf32>
    %147 = vector.broadcast %27 : vector<1x32xf32> to vector<2x32xf32>
    %148 = arith.addf %146, %147 : vector<2x32xf32>
    %149 = arith.mulf %136, %148 : vector<2x32xf32>
    %150 = arith.addf %145, %149 : vector<2x32xf32>
    %151 = math.tanh %150 : vector<2x32xf32>
    %cst_53 = arith.constant 1.000000e+00 : f32
    %152 = vector.broadcast %cst_53 : f32 to vector<2x32xf32>
    %153 = arith.subf %152, %144 : vector<2x32xf32>
    %154 = arith.mulf %153, %151 : vector<2x32xf32>
    %155 = arith.mulf %144, %124 : vector<2x32xf32>
    %156 = arith.addf %154, %155 : vector<2x32xf32>
    %c4_i32 = arith.constant 4 : i32
    %c2_i32_54 = arith.constant 2 : i32
    %157 = arith.muli %c4_i32, %c2_i32_54 : i32
    %158 = arith.index_cast %157 : i32 to index
    %c0_55 = arith.constant 0 : index
    %159 = vector.load %arg23[%158, %c0_55] : memref<16x96xf32, #tpu.memory_space<vmem>>, vector<2x96xf32>
    %cst_56 = arith.constant dense<0.000000e+00> : vector<2x96xf32>
    %160 = tpu.matmul %156, %26, %cst_56 {dimension_numbers = #tpu.dot_dimension_numbers<[1], [0], [0], [1], [0, 0, 1, 1], [], []>} : vector<2x32xf32>, vector<32x96xf32>, vector<2x96xf32> -> vector<2x96xf32>
    %161 = vector.extract_strided_slice %159 {offsets = [0, 0], sizes = [2, 32], strides = [1, 1]} : vector<2x96xf32> to vector<2x32xf32>
    %162 = vector.extract_strided_slice %160 {offsets = [0, 0], sizes = [2, 32], strides = [1, 1]} : vector<2x96xf32> to vector<2x32xf32>
    %163 = arith.addf %161, %162 : vector<2x32xf32>
    %164 = arith.negf %163 : vector<2x32xf32>
    %165 = math.exp %164 : vector<2x32xf32>
    %cst_57 = arith.constant 1.000000e+00 : f32
    %166 = vector.broadcast %cst_57 : f32 to vector<2x32xf32>
    %167 = arith.addf %166, %165 : vector<2x32xf32>
    %168 = arith.divf %166, %167 : vector<2x32xf32>
    %169 = vector.extract_strided_slice %159 {offsets = [0, 32], sizes = [2, 32], strides = [1, 1]} : vector<2x96xf32> to vector<2x32xf32>
    %170 = vector.extract_strided_slice %160 {offsets = [0, 32], sizes = [2, 32], strides = [1, 1]} : vector<2x96xf32> to vector<2x32xf32>
    %171 = arith.addf %169, %170 : vector<2x32xf32>
    %172 = arith.negf %171 : vector<2x32xf32>
    %173 = math.exp %172 : vector<2x32xf32>
    %cst_58 = arith.constant 1.000000e+00 : f32
    %174 = vector.broadcast %cst_58 : f32 to vector<2x32xf32>
    %175 = arith.addf %174, %173 : vector<2x32xf32>
    %176 = arith.divf %174, %175 : vector<2x32xf32>
    %177 = vector.extract_strided_slice %159 {offsets = [0, 64], sizes = [2, 32], strides = [1, 1]} : vector<2x96xf32> to vector<2x32xf32>
    %178 = vector.extract_strided_slice %160 {offsets = [0, 64], sizes = [2, 32], strides = [1, 1]} : vector<2x96xf32> to vector<2x32xf32>
    %179 = vector.broadcast %27 : vector<1x32xf32> to vector<2x32xf32>
    %180 = arith.addf %178, %179 : vector<2x32xf32>
    %181 = arith.mulf %168, %180 : vector<2x32xf32>
    %182 = arith.addf %177, %181 : vector<2x32xf32>
    %183 = math.tanh %182 : vector<2x32xf32>
    %cst_59 = arith.constant 1.000000e+00 : f32
    %184 = vector.broadcast %cst_59 : f32 to vector<2x32xf32>
    %185 = arith.subf %184, %176 : vector<2x32xf32>
    %186 = arith.mulf %185, %183 : vector<2x32xf32>
    %187 = arith.mulf %176, %156 : vector<2x32xf32>
    %188 = arith.addf %186, %187 : vector<2x32xf32>
    %c5_i32 = arith.constant 5 : i32
    %c2_i32_60 = arith.constant 2 : i32
    %189 = arith.muli %c5_i32, %c2_i32_60 : i32
    %190 = arith.index_cast %189 : i32 to index
    %c0_61 = arith.constant 0 : index
    %191 = vector.load %arg23[%190, %c0_61] : memref<16x96xf32, #tpu.memory_space<vmem>>, vector<2x96xf32>
    %cst_62 = arith.constant dense<0.000000e+00> : vector<2x96xf32>
    %192 = tpu.matmul %188, %26, %cst_62 {dimension_numbers = #tpu.dot_dimension_numbers<[1], [0], [0], [1], [0, 0, 1, 1], [], []>} : vector<2x32xf32>, vector<32x96xf32>, vector<2x96xf32> -> vector<2x96xf32>
    %193 = vector.extract_strided_slice %191 {offsets = [0, 0], sizes = [2, 32], strides = [1, 1]} : vector<2x96xf32> to vector<2x32xf32>
    %194 = vector.extract_strided_slice %192 {offsets = [0, 0], sizes = [2, 32], strides = [1, 1]} : vector<2x96xf32> to vector<2x32xf32>
    %195 = arith.addf %193, %194 : vector<2x32xf32>
    %196 = arith.negf %195 : vector<2x32xf32>
    %197 = math.exp %196 : vector<2x32xf32>
    %cst_63 = arith.constant 1.000000e+00 : f32
    %198 = vector.broadcast %cst_63 : f32 to vector<2x32xf32>
    %199 = arith.addf %198, %197 : vector<2x32xf32>
    %200 = arith.divf %198, %199 : vector<2x32xf32>
    %201 = vector.extract_strided_slice %191 {offsets = [0, 32], sizes = [2, 32], strides = [1, 1]} : vector<2x96xf32> to vector<2x32xf32>
    %202 = vector.extract_strided_slice %192 {offsets = [0, 32], sizes = [2, 32], strides = [1, 1]} : vector<2x96xf32> to vector<2x32xf32>
    %203 = arith.addf %201, %202 : vector<2x32xf32>
    %204 = arith.negf %203 : vector<2x32xf32>
    %205 = math.exp %204 : vector<2x32xf32>
    %cst_64 = arith.constant 1.000000e+00 : f32
    %206 = vector.broadcast %cst_64 : f32 to vector<2x32xf32>
    %207 = arith.addf %206, %205 : vector<2x32xf32>
    %208 = arith.divf %206, %207 : vector<2x32xf32>
    %209 = vector.extract_strided_slice %191 {offsets = [0, 64], sizes = [2, 32], strides = [1, 1]} : vector<2x96xf32> to vector<2x32xf32>
    %210 = vector.extract_strided_slice %192 {offsets = [0, 64], sizes = [2, 32], strides = [1, 1]} : vector<2x96xf32> to vector<2x32xf32>
    %211 = vector.broadcast %27 : vector<1x32xf32> to vector<2x32xf32>
    %212 = arith.addf %210, %211 : vector<2x32xf32>
    %213 = arith.mulf %200, %212 : vector<2x32xf32>
    %214 = arith.addf %209, %213 : vector<2x32xf32>
    %215 = math.tanh %214 : vector<2x32xf32>
    %cst_65 = arith.constant 1.000000e+00 : f32
    %216 = vector.broadcast %cst_65 : f32 to vector<2x32xf32>
    %217 = arith.subf %216, %208 : vector<2x32xf32>
    %218 = arith.mulf %217, %215 : vector<2x32xf32>
    %219 = arith.mulf %208, %188 : vector<2x32xf32>
    %220 = arith.addf %218, %219 : vector<2x32xf32>
    %c6_i32 = arith.constant 6 : i32
    %c2_i32_66 = arith.constant 2 : i32
    %221 = arith.muli %c6_i32, %c2_i32_66 : i32
    %222 = arith.index_cast %221 : i32 to index
    %c0_67 = arith.constant 0 : index
    %223 = vector.load %arg23[%222, %c0_67] : memref<16x96xf32, #tpu.memory_space<vmem>>, vector<2x96xf32>
    %cst_68 = arith.constant dense<0.000000e+00> : vector<2x96xf32>
    %224 = tpu.matmul %220, %26, %cst_68 {dimension_numbers = #tpu.dot_dimension_numbers<[1], [0], [0], [1], [0, 0, 1, 1], [], []>} : vector<2x32xf32>, vector<32x96xf32>, vector<2x96xf32> -> vector<2x96xf32>
    %225 = vector.extract_strided_slice %223 {offsets = [0, 0], sizes = [2, 32], strides = [1, 1]} : vector<2x96xf32> to vector<2x32xf32>
    %226 = vector.extract_strided_slice %224 {offsets = [0, 0], sizes = [2, 32], strides = [1, 1]} : vector<2x96xf32> to vector<2x32xf32>
    %227 = arith.addf %225, %226 : vector<2x32xf32>
    %228 = arith.negf %227 : vector<2x32xf32>
    %229 = math.exp %228 : vector<2x32xf32>
    %cst_69 = arith.constant 1.000000e+00 : f32
    %230 = vector.broadcast %cst_69 : f32 to vector<2x32xf32>
    %231 = arith.addf %230, %229 : vector<2x32xf32>
    %232 = arith.divf %230, %231 : vector<2x32xf32>
    %233 = vector.extract_strided_slice %223 {offsets = [0, 32], sizes = [2, 32], strides = [1, 1]} : vector<2x96xf32> to vector<2x32xf32>
    %234 = vector.extract_strided_slice %224 {offsets = [0, 32], sizes = [2, 32], strides = [1, 1]} : vector<2x96xf32> to vector<2x32xf32>
    %235 = arith.addf %233, %234 : vector<2x32xf32>
    %236 = arith.negf %235 : vector<2x32xf32>
    %237 = math.exp %236 : vector<2x32xf32>
    %cst_70 = arith.constant 1.000000e+00 : f32
    %238 = vector.broadcast %cst_70 : f32 to vector<2x32xf32>
    %239 = arith.addf %238, %237 : vector<2x32xf32>
    %240 = arith.divf %238, %239 : vector<2x32xf32>
    %241 = vector.extract_strided_slice %223 {offsets = [0, 64], sizes = [2, 32], strides = [1, 1]} : vector<2x96xf32> to vector<2x32xf32>
    %242 = vector.extract_strided_slice %224 {offsets = [0, 64], sizes = [2, 32], strides = [1, 1]} : vector<2x96xf32> to vector<2x32xf32>
    %243 = vector.broadcast %27 : vector<1x32xf32> to vector<2x32xf32>
    %244 = arith.addf %242, %243 : vector<2x32xf32>
    %245 = arith.mulf %232, %244 : vector<2x32xf32>
    %246 = arith.addf %241, %245 : vector<2x32xf32>
    %247 = math.tanh %246 : vector<2x32xf32>
    %cst_71 = arith.constant 1.000000e+00 : f32
    %248 = vector.broadcast %cst_71 : f32 to vector<2x32xf32>
    %249 = arith.subf %248, %240 : vector<2x32xf32>
    %250 = arith.mulf %249, %247 : vector<2x32xf32>
    %251 = arith.mulf %240, %220 : vector<2x32xf32>
    %252 = arith.addf %250, %251 : vector<2x32xf32>
    %c7_i32 = arith.constant 7 : i32
    %c2_i32_72 = arith.constant 2 : i32
    %253 = arith.muli %c7_i32, %c2_i32_72 : i32
    %254 = arith.index_cast %253 : i32 to index
    %c0_73 = arith.constant 0 : index
    %255 = vector.load %arg23[%254, %c0_73] : memref<16x96xf32, #tpu.memory_space<vmem>>, vector<2x96xf32>
    %cst_74 = arith.constant dense<0.000000e+00> : vector<2x96xf32>
    %256 = tpu.matmul %252, %26, %cst_74 {dimension_numbers = #tpu.dot_dimension_numbers<[1], [0], [0], [1], [0, 0, 1, 1], [], []>} : vector<2x32xf32>, vector<32x96xf32>, vector<2x96xf32> -> vector<2x96xf32>
    %257 = vector.extract_strided_slice %255 {offsets = [0, 0], sizes = [2, 32], strides = [1, 1]} : vector<2x96xf32> to vector<2x32xf32>
    %258 = vector.extract_strided_slice %256 {offsets = [0, 0], sizes = [2, 32], strides = [1, 1]} : vector<2x96xf32> to vector<2x32xf32>
    %259 = arith.addf %257, %258 : vector<2x32xf32>
    %260 = arith.negf %259 : vector<2x32xf32>
    %261 = math.exp %260 : vector<2x32xf32>
    %cst_75 = arith.constant 1.000000e+00 : f32
    %262 = vector.broadcast %cst_75 : f32 to vector<2x32xf32>
    %263 = arith.addf %262, %261 : vector<2x32xf32>
    %264 = arith.divf %262, %263 : vector<2x32xf32>
    %265 = vector.extract_strided_slice %255 {offsets = [0, 32], sizes = [2, 32], strides = [1, 1]} : vector<2x96xf32> to vector<2x32xf32>
    %266 = vector.extract_strided_slice %256 {offsets = [0, 32], sizes = [2, 32], strides = [1, 1]} : vector<2x96xf32> to vector<2x32xf32>
    %267 = arith.addf %265, %266 : vector<2x32xf32>
    %268 = arith.negf %267 : vector<2x32xf32>
    %269 = math.exp %268 : vector<2x32xf32>
    %cst_76 = arith.constant 1.000000e+00 : f32
    %270 = vector.broadcast %cst_76 : f32 to vector<2x32xf32>
    %271 = arith.addf %270, %269 : vector<2x32xf32>
    %272 = arith.divf %270, %271 : vector<2x32xf32>
    %273 = vector.extract_strided_slice %255 {offsets = [0, 64], sizes = [2, 32], strides = [1, 1]} : vector<2x96xf32> to vector<2x32xf32>
    %274 = vector.extract_strided_slice %256 {offsets = [0, 64], sizes = [2, 32], strides = [1, 1]} : vector<2x96xf32> to vector<2x32xf32>
    %275 = vector.broadcast %27 : vector<1x32xf32> to vector<2x32xf32>
    %276 = arith.addf %274, %275 : vector<2x32xf32>
    %277 = arith.mulf %264, %276 : vector<2x32xf32>
    %278 = arith.addf %273, %277 : vector<2x32xf32>
    %279 = math.tanh %278 : vector<2x32xf32>
    %cst_77 = arith.constant 1.000000e+00 : f32
    %280 = vector.broadcast %cst_77 : f32 to vector<2x32xf32>
    %281 = arith.subf %280, %272 : vector<2x32xf32>
    %282 = arith.mulf %281, %279 : vector<2x32xf32>
    %283 = arith.mulf %272, %252 : vector<2x32xf32>
    %284 = arith.addf %282, %283 : vector<2x32xf32>
    %c8_i32 = arith.constant 8 : i32
    %c0_78 = arith.constant 0 : index
    %c0_79 = arith.constant 0 : index
    %285 = vector.load %arg12[%c0_78, %c0_79] : memref<32x128xf32, #tpu.memory_space<vmem>>, vector<32x128xf32>
    %cst_80 = arith.constant dense<0.000000e+00> : vector<2x128xf32>
    %286 = tpu.matmul %284, %285, %cst_80 {dimension_numbers = #tpu.dot_dimension_numbers<[1], [0], [0], [1], [0, 0, 1, 1], [], []>} : vector<2x32xf32>, vector<32x128xf32>, vector<2x128xf32> -> vector<2x128xf32>
    %c0_81 = arith.constant 0 : index
    %c0_82 = arith.constant 0 : index
    %287 = vector.load %arg13[%c0_81, %c0_82] : memref<1x128xf32, #tpu.memory_space<vmem>>, vector<1x128xf32>
    %288 = vector.broadcast %287 : vector<1x128xf32> to vector<2x128xf32>
    %289 = arith.addf %286, %288 : vector<2x128xf32>
    %c0_83 = arith.constant 0 : index
    %c0_84 = arith.constant 0 : index
    %290 = vector.load %arg14[%c0_83, %c0_84] : memref<1x128xf32, #tpu.memory_space<vmem>>, vector<1x128xf32>
    %c0_85 = arith.constant 0 : index
    %c0_86 = arith.constant 0 : index
    %291 = vector.load %arg15[%c0_85, %c0_86] : memref<1x128xf32, #tpu.memory_space<vmem>>, vector<1x128xf32>
    %cst_87 = arith.constant dense<0.000000e+00> : vector<128xf32>
    %292 = vector.multi_reduction <add>, %289, %cst_87 [0] : vector<2x128xf32> to vector<128xf32>
    %293 = vector.shape_cast %292 : vector<128xf32> to vector<1x128xf32>
    %cst_88 = arith.constant 2.000000e+00 : f32
    %294 = vector.broadcast %cst_88 : f32 to vector<1x128xf32>
    %295 = arith.divf %293, %294 : vector<1x128xf32>
    %296 = vector.broadcast %295 : vector<1x128xf32> to vector<2x128xf32>
    %297 = arith.subf %289, %296 : vector<2x128xf32>
    %298 = vector.broadcast %295 : vector<1x128xf32> to vector<2x128xf32>
    %299 = arith.subf %289, %298 : vector<2x128xf32>
    %300 = arith.mulf %297, %299 : vector<2x128xf32>
    %cst_89 = arith.constant dense<0.000000e+00> : vector<128xf32>
    %301 = vector.multi_reduction <add>, %300, %cst_89 [0] : vector<2x128xf32> to vector<128xf32>
    %302 = vector.shape_cast %301 : vector<128xf32> to vector<1x128xf32>
    %cst_90 = arith.constant 2.000000e+00 : f32
    %303 = vector.broadcast %cst_90 : f32 to vector<1x128xf32>
    %304 = arith.divf %302, %303 : vector<1x128xf32>
    %305 = vector.broadcast %295 : vector<1x128xf32> to vector<2x128xf32>
    %306 = arith.subf %289, %305 : vector<2x128xf32>
    %cst_91 = arith.constant 9.99999974E-6 : f32
    %307 = vector.broadcast %cst_91 : f32 to vector<1x128xf32>
    %308 = arith.addf %304, %307 : vector<1x128xf32>
    %309 = math.rsqrt %308 : vector<1x128xf32>
    %310 = vector.broadcast %309 : vector<1x128xf32> to vector<2x128xf32>
    %311 = arith.mulf %306, %310 : vector<2x128xf32>
    %312 = vector.broadcast %290 : vector<1x128xf32> to vector<2x128xf32>
    %313 = arith.mulf %311, %312 : vector<2x128xf32>
    %314 = vector.broadcast %291 : vector<1x128xf32> to vector<2x128xf32>
    %315 = arith.addf %313, %314 : vector<2x128xf32>
    %c0_92 = arith.constant 0 : index
    %c0_93 = arith.constant 0 : index
    %316 = vector.load %arg16[%c0_92, %c0_93] : memref<128x256xf32, #tpu.memory_space<vmem>>, vector<128x256xf32>
    %cst_94 = arith.constant dense<0.000000e+00> : vector<2x256xf32>
    %317 = tpu.matmul %315, %316, %cst_94 {dimension_numbers = #tpu.dot_dimension_numbers<[1], [0], [0], [1], [0, 0, 1, 1], [], []>} : vector<2x128xf32>, vector<128x256xf32>, vector<2x256xf32> -> vector<2x256xf32>
    %c0_95 = arith.constant 0 : index
    %c0_96 = arith.constant 0 : index
    %318 = vector.load %arg17[%c0_95, %c0_96] : memref<1x256xf32, #tpu.memory_space<vmem>>, vector<1x256xf32>
    %319 = vector.broadcast %318 : vector<1x256xf32> to vector<2x256xf32>
    %320 = arith.addf %317, %319 : vector<2x256xf32>
    %c0_97 = arith.constant 0 : index
    %c0_98 = arith.constant 0 : index
    %321 = vector.load %arg18[%c0_97, %c0_98] : memref<1x256xf32, #tpu.memory_space<vmem>>, vector<1x256xf32>
    %c0_99 = arith.constant 0 : index
    %c0_100 = arith.constant 0 : index
    %322 = vector.load %arg19[%c0_99, %c0_100] : memref<1x256xf32, #tpu.memory_space<vmem>>, vector<1x256xf32>
    %cst_101 = arith.constant dense<0.000000e+00> : vector<256xf32>
    %323 = vector.multi_reduction <add>, %320, %cst_101 [0] : vector<2x256xf32> to vector<256xf32>
    %324 = vector.shape_cast %323 : vector<256xf32> to vector<1x256xf32>
    %cst_102 = arith.constant 2.000000e+00 : f32
    %325 = vector.broadcast %cst_102 : f32 to vector<1x256xf32>
    %326 = arith.divf %324, %325 : vector<1x256xf32>
    %327 = vector.broadcast %326 : vector<1x256xf32> to vector<2x256xf32>
    %328 = arith.subf %320, %327 : vector<2x256xf32>
    %329 = vector.broadcast %326 : vector<1x256xf32> to vector<2x256xf32>
    %330 = arith.subf %320, %329 : vector<2x256xf32>
    %331 = arith.mulf %328, %330 : vector<2x256xf32>
    %cst_103 = arith.constant dense<0.000000e+00> : vector<256xf32>
    %332 = vector.multi_reduction <add>, %331, %cst_103 [0] : vector<2x256xf32> to vector<256xf32>
    %333 = vector.shape_cast %332 : vector<256xf32> to vector<1x256xf32>
    %cst_104 = arith.constant 2.000000e+00 : f32
    %334 = vector.broadcast %cst_104 : f32 to vector<1x256xf32>
    %335 = arith.divf %333, %334 : vector<1x256xf32>
    %336 = vector.broadcast %326 : vector<1x256xf32> to vector<2x256xf32>
    %337 = arith.subf %320, %336 : vector<2x256xf32>
    %cst_105 = arith.constant 9.99999974E-6 : f32
    %338 = vector.broadcast %cst_105 : f32 to vector<1x256xf32>
    %339 = arith.addf %335, %338 : vector<1x256xf32>
    %340 = math.rsqrt %339 : vector<1x256xf32>
    %341 = vector.broadcast %340 : vector<1x256xf32> to vector<2x256xf32>
    %342 = arith.mulf %337, %341 : vector<2x256xf32>
    %343 = vector.broadcast %321 : vector<1x256xf32> to vector<2x256xf32>
    %344 = arith.mulf %342, %343 : vector<2x256xf32>
    %345 = vector.broadcast %322 : vector<1x256xf32> to vector<2x256xf32>
    %346 = arith.addf %344, %345 : vector<2x256xf32>
    %c0_106 = arith.constant 0 : index
    %c0_107 = arith.constant 0 : index
    %347 = vector.load %arg20[%c0_106, %c0_107] : memref<256x3xf32, #tpu.memory_space<vmem>>, vector<256x3xf32>
    %cst_108 = arith.constant dense<0.000000e+00> : vector<2x3xf32>
    %348 = tpu.matmul %346, %347, %cst_108 {dimension_numbers = #tpu.dot_dimension_numbers<[1], [0], [0], [1], [0, 0, 1, 1], [], []>} : vector<2x256xf32>, vector<256x3xf32>, vector<2x3xf32> -> vector<2x3xf32>
    %c0_109 = arith.constant 0 : index
    %c0_110 = arith.constant 0 : index
    %349 = vector.load %arg21[%c0_109, %c0_110] : memref<1x3xf32, #tpu.memory_space<vmem>>, vector<1x3xf32>
    %350 = vector.broadcast %349 : vector<1x3xf32> to vector<2x3xf32>
    %351 = arith.addf %348, %350 : vector<2x3xf32>
    %c0_111 = arith.constant 0 : index
    %c0_112 = arith.constant 0 : index
    %352 = vector.load %arg22[%c0_111, %c0_112] : memref<2x3xf32, #tpu.memory_space<vmem>>, vector<2x3xf32>
    tpu.vector_store %arg22[%c0_111, %c0_112], %351 {strides = array<i32>} : memref<2x3xf32, #tpu.memory_space<vmem>>, vector<2x3xf32>,
    return
  }
}

</mosaic_0001>

<llo_original>
// kernel: tpu_custom_call.1
$region0: #{tpu_custom_call.1}
  #allocation0 [shape = 'u32[]', space=smem, size = 0x4, offset = 0x4, fixed_abs, tag = 'smem constant byte address 0x4 - core index']
  #allocation1 [shape = 'u32[144,128]{1,0:T(1,128)}', space=vmem, size = 0x12000, scoped, tag = 'internal scratch']
  #allocation2 [shape = 'f32[16,96]{1,0:T(8,128)}', space=vmem, size = 0x2000, scoped, tag = 'scratch operand']
  #allocation3 [shape = 'f32[1,1]{1,0:T(1,128)S(1)}', space=vmem, size = 0x200, scoped, tag = 'scoped memory for tpu_custom_call.1']
  %s0 = inlined_call_operand.vmem [shape: f32[16,4], index: 0, kind: input, shape index: {}]
  %s1 = inlined_call_operand.vmem [shape: f32[4,15], index: 1, kind: input, shape index: {}]
  %s2 = inlined_call_operand.vmem [shape: f32[1,15], index: 2, kind: input, shape index: {}]
  %s3 = inlined_call_operand.vmem [shape: f32[4,1], index: 3, kind: input, shape index: {}]
  %s4 = inlined_call_operand.<no memory space> [shape: f32[1,1], index: 4, kind: input, shape index: {}]
  %s5 = inlined_call_operand.vmem [shape: f32[15,4], index: 5, kind: input, shape index: {}]
  %s6 = inlined_call_operand.vmem [shape: f32[1,4], index: 6, kind: input, shape index: {}]
  %s7 = inlined_call_operand.vmem [shape: f32[1,4], index: 7, kind: input, shape index: {}]
  %s8 = inlined_call_operand.vmem [shape: f32[4,96], index: 8, kind: input, shape index: {}]
  %s9 = inlined_call_operand.vmem [shape: f32[1,96], index: 9, kind: input, shape index: {}]
  %s10 = inlined_call_operand.vmem [shape: f32[32,96], index: 10, kind: input, shape index: {}]
  %s11 = inlined_call_operand.vmem [shape: f32[1,32], index: 11, kind: input, shape index: {}]
  %s12 = inlined_call_operand.vmem [shape: f32[32,128], index: 12, kind: input, shape index: {}]
  %s13 = inlined_call_operand.vmem [shape: f32[1,128], index: 13, kind: input, shape index: {}]
  %s14 = inlined_call_operand.vmem [shape: f32[1,128], index: 14, kind: input, shape index: {}]
  %s15 = inlined_call_operand.vmem [shape: f32[1,128], index: 15, kind: input, shape index: {}]
  %s16 = inlined_call_operand.vmem [shape: f32[128,256], index: 16, kind: input, shape index: {}]
  %s17 = inlined_call_operand.vmem [shape: f32[1,256], index: 17, kind: input, shape index: {}]
  %s18 = inlined_call_operand.vmem [shape: f32[1,256], index: 18, kind: input, shape index: {}]
  %s19 = inlined_call_operand.vmem [shape: f32[1,256], index: 19, kind: input, shape index: {}]
  %s20 = inlined_call_operand.vmem [shape: f32[256,3], index: 20, kind: input, shape index: {}]
  %s21 = inlined_call_operand.vmem [shape: f32[1,3], index: 21, kind: input, shape index: {}]
  %s22 = inlined_call_operand.hbm [shape: f32[2,3], index: 22, kind: output, shape index: {}]
  %s23 = sld [smem:[#allocation0]]
  $region98: #{tpu_custom_call.1} parent=0
    _
  %s25 = ssub.s32 1, %s23
  %s26 = scalar_select 0, %s25, %s23
  %v27 = vstv %s4
  %28 = vst [vmem:[#allocation3] sm:$0x1] %v27
  $region1: #{tpu_custom_call.1} parent=0
    #allocation4 [shape = 'u8[1024]{0}', space=vmem, size = 0x400, scoped, tag = 'output window, operand 0, single buffered']
    #allocation5 [shape = 's32[1]{0}', space=sflag, size = 0x4, scoped, tag = 'scoped memory for tpu_custom_call.1']
    %29 = vsyncpa [#allocation5], 0
    // Predicated region
    $region2: #{tpu_custom_call.1} parent=1 // pred_check
      _
    $region3: #{tpu_custom_call.1} parent=1 // pred_check_branch
      %31 = sbr.rel (0) target = $region5
    $region4: #{tpu_custom_call.1} parent=1 // pred_region
      _
    $region5: #{tpu_custom_call.1} parent=1 // pred_fallthru
      _
    // Predicated region
    $region6: #{tpu_custom_call.1} parent=1 // pred_check
      _
    $region7: #{tpu_custom_call.1} parent=1 // pred_check_branch
      %33 = sbr.rel (0) target = $region9
    $region8: #{tpu_custom_call.1} parent=1 // pred_region
      _
    $region9: #{tpu_custom_call.1} parent=1 // pred_fallthru
      _
    // Predicated region
    $region10: #{tpu_custom_call.1} parent=1 // pred_check
      _
    $region11: #{tpu_custom_call.1} parent=1 // pred_check_branch
      %35 = sbr.rel (0) target = $region13
    $region12: #{tpu_custom_call.1} parent=1 // pred_region
      _
    $region13: #{tpu_custom_call.1} parent=1 // pred_fallthru
      _
    // Predicated region
    $region14: #{tpu_custom_call.1} parent=1 // pred_check
      _
    $region15: #{tpu_custom_call.1} parent=1 // pred_check_branch
      %37 = sbr.rel (0) target = $region17
    $region16: #{tpu_custom_call.1} parent=1 // pred_region
      _
    $region17: #{tpu_custom_call.1} parent=1 // pred_fallthru
      _
    // Predicated region
    $region18: #{tpu_custom_call.1} parent=1 // pred_check
      _
    $region19: #{tpu_custom_call.1} parent=1 // pred_check_branch
      %39 = sbr.rel (0) target = $region21
    $region20: #{tpu_custom_call.1} parent=1 // pred_region
      _
    $region21: #{tpu_custom_call.1} parent=1 // pred_fallthru
      _
    // Predicated region
    $region22: #{tpu_custom_call.1} parent=1 // pred_check
      _
    $region23: #{tpu_custom_call.1} parent=1 // pred_check_branch
      %41 = sbr.rel (0) target = $region25
    $region24: #{tpu_custom_call.1} parent=1 // pred_region
      _
    $region25: #{tpu_custom_call.1} parent=1 // pred_fallthru
      _
    // Predicated region
    $region26: #{tpu_custom_call.1} parent=1 // pred_check
      _
    $region27: #{tpu_custom_call.1} parent=1 // pred_check_branch
      %43 = sbr.rel (0) target = $region29
    $region28: #{tpu_custom_call.1} parent=1 // pred_region
      _
    $region29: #{tpu_custom_call.1} parent=1 // pred_fallthru
      _
    // Predicated region
    $region30: #{tpu_custom_call.1} parent=1 // pred_check
      _
    $region31: #{tpu_custom_call.1} parent=1 // pred_check_branch
      %45 = sbr.rel (0) target = $region33
    $region32: #{tpu_custom_call.1} parent=1 // pred_region
      _
    $region33: #{tpu_custom_call.1} parent=1 // pred_fallthru
      _
    // Predicated region
    $region34: #{tpu_custom_call.1} parent=1 // pred_check
      _
    $region35: #{tpu_custom_call.1} parent=1 // pred_check_branch
      %47 = sbr.rel (0) target = $region37
    $region36: #{tpu_custom_call.1} parent=1 // pred_region
      _
    $region37: #{tpu_custom_call.1} parent=1 // pred_fallthru
      _
    // Predicated region
    $region38: #{tpu_custom_call.1} parent=1 // pred_check
      _
    $region39: #{tpu_custom_call.1} parent=1 // pred_check_branch
      %49 = sbr.rel (0) target = $region41
    $region40: #{tpu_custom_call.1} parent=1 // pred_region
      _
    $region41: #{tpu_custom_call.1} parent=1 // pred_fallthru
      _
    // Predicated region
    $region42: #{tpu_custom_call.1} parent=1 // pred_check
      _
    $region43: #{tpu_custom_call.1} parent=1 // pred_check_branch
      %51 = sbr.rel (0) target = $region45
    $region44: #{tpu_custom_call.1} parent=1 // pred_region
      _
    $region45: #{tpu_custom_call.1} parent=1 // pred_fallthru
      _
    // Predicated region
    $region46: #{tpu_custom_call.1} parent=1 // pred_check
      _
    $region47: #{tpu_custom_call.1} parent=1 // pred_check_branch
      %53 = sbr.rel (0) target = $region49
    $region48: #{tpu_custom_call.1} parent=1 // pred_region
      _
    $region49: #{tpu_custom_call.1} parent=1 // pred_fallthru
      _
    // Predicated region
    $region50: #{tpu_custom_call.1} parent=1 // pred_check
      _
    $region51: #{tpu_custom_call.1} parent=1 // pred_check_branch
      %55 = sbr.rel (0) target = $region53
    $region52: #{tpu_custom_call.1} parent=1 // pred_region
      _
    $region53: #{tpu_custom_call.1} parent=1 // pred_fallthru
      _
    // Predicated region
    $region54: #{tpu_custom_call.1} parent=1 // pred_check
      _
    $region55: #{tpu_custom_call.1} parent=1 // pred_check_branch
      %57 = sbr.rel (0) target = $region57
    $region56: #{tpu_custom_call.1} parent=1 // pred_region
      _
    $region57: #{tpu_custom_call.1} parent=1 // pred_fallthru
      _
    // Predicated region
    $region58: #{tpu_custom_call.1} parent=1 // pred_check
      _
    $region59: #{tpu_custom_call.1} parent=1 // pred_check_branch
      %59 = sbr.rel (0) target = $region61
    $region60: #{tpu_custom_call.1} parent=1 // pred_region
      _
    $region61: #{tpu_custom_call.1} parent=1 // pred_fallthru
      _
    // Predicated region
    $region62: #{tpu_custom_call.1} parent=1 // pred_check
      _
    $region63: #{tpu_custom_call.1} parent=1 // pred_check_branch
      %61 = sbr.rel (0) target = $region65
    $region64: #{tpu_custom_call.1} parent=1 // pred_region
      _
    $region65: #{tpu_custom_call.1} parent=1 // pred_fallthru
      _
    // Predicated region
    $region66: #{tpu_custom_call.1} parent=1 // pred_check
      _
    $region67: #{tpu_custom_call.1} parent=1 // pred_check_branch
      %63 = sbr.rel (0) target = $region69
    $region68: #{tpu_custom_call.1} parent=1 // pred_region
      _
    $region69: #{tpu_custom_call.1} parent=1 // pred_fallthru
      _
    // Predicated region
    $region70: #{tpu_custom_call.1} parent=1 // pred_check
      _
    $region71: #{tpu_custom_call.1} parent=1 // pred_check_branch
      %65 = sbr.rel (0) target = $region73
    $region72: #{tpu_custom_call.1} parent=1 // pred_region
      _
    $region73: #{tpu_custom_call.1} parent=1 // pred_fallthru
      _
    // Predicated region
    $region74: #{tpu_custom_call.1} parent=1 // pred_check
      _
    $region75: #{tpu_custom_call.1} parent=1 // pred_check_branch
      %67 = sbr.rel (0) target = $region77
    $region76: #{tpu_custom_call.1} parent=1 // pred_region
      _
    $region77: #{tpu_custom_call.1} parent=1 // pred_fallthru
      _
    // Predicated region
    $region78: #{tpu_custom_call.1} parent=1 // pred_check
      _
    $region79: #{tpu_custom_call.1} parent=1 // pred_check_branch
      %69 = sbr.rel (0) target = $region81
    $region80: #{tpu_custom_call.1} parent=1 // pred_region
      _
    $region81: #{tpu_custom_call.1} parent=1 // pred_fallthru
      _
    // Predicated region
    $region82: #{tpu_custom_call.1} parent=1 // pred_check
      _
    $region83: #{tpu_custom_call.1} parent=1 // pred_check_branch
      %71 = sbr.rel (0) target = $region85
    $region84: #{tpu_custom_call.1} parent=1 // pred_region
      _
    $region85: #{tpu_custom_call.1} parent=1 // pred_fallthru
      _
    // Predicated region
    $region86: #{tpu_custom_call.1} parent=1 // pred_check
      _
    $region87: #{tpu_custom_call.1} parent=1 // pred_check_branch
      %73 = sbr.rel (0) target = $region89
    $region88: #{tpu_custom_call.1} parent=1 // pred_region
      _
    $region89: #{tpu_custom_call.1} parent=1 // pred_fallthru
      _
    %v74 = vld [vmem:[%s0] sm:$0xff]
    %v75 = vld [vmem:[%s0 + $0x8] sm:$0xff]
    %v76 = vld [vmem:[%s1] sm:$0xf]
    %v77 = vld [vmem:[%s2] sm:$0x1]
    %v79 = vlaneseq
    %v80 = vshrl.u32 %v79, 7
    %v81 = vsub.s32 0, %v80
    %v82 = vrot.slane %v77, %v81
    %vm84 = vcmask 31744
    %v86 = vsel %vm84, %v74, 0
    %v89 = vsel %vm84, %v75, 0
    %vm91 = vcmask 1043456
    %v93 = vsel %vm91, %v76, 0
    %95 = vmatprep.subr.mxu0 0.0
    %96 = vmatpush1.msra.mxu0 %v93
    %97 = vmatprep.subr.mxu0 0.0
    %98 = vmatpush1.msra.mxu0 0.0
    %99 = vmatprep.subr.mxu0 0.0
    %100 = vmatpush1.msra.mxu0 0.0
    %101 = vmatprep.subr.mxu0 0.0
    %102 = vmatpush1.msra.mxu0 0.0
    %103 = vmatprep.subr.mxu0 0.0
    %104 = vmatpush1.msra.mxu0 0.0
    %105 = vmatprep.subr.mxu0 0.0
    %106 = vmatpush1.msra.mxu0 0.0
    %107 = vmatprep.subr.mxu0 0.0
    %108 = vmatpush1.msra.mxu0 0.0
    %109 = vmatprep.subr.mxu0 0.0
    %110 = vmatpush1.msra.mxu0 0.0
    %111 = vmatprep.subr.mxu0 0.0
    %112 = vmatpush1.msra.mxu0 0.0
    %113 = vmatprep.subr.mxu0 0.0
    %114 = vmatpush1.msra.mxu0 0.0
    %115 = vmatprep.subr.mxu0 0.0
    %116 = vmatpush1.msra.mxu0 0.0
    %117 = vmatprep.subr.mxu0 0.0
    %118 = vmatpush1.msra.mxu0 0.0
    %119 = vmatprep.subr.mxu0 0.0
    %120 = vmatpush1.msra.mxu0 0.0
    %121 = vmatprep.subr.mxu0 0.0
    %122 = vmatpush1.msra.mxu0 0.0
    %123 = vmatprep.subr.mxu0 0.0
    %124 = vmatpush1.msra.mxu0 0.0
    %125 = vmatprep.subr.mxu0 0.0
    %126 = vmatpush1.msra.mxu0 0.0
    %127 = vmatprep.subr.mxu0 0.0
    %128 = vmatpush1.msra.mxu0 0.0
    %129 = vmatprep.subr.mxu0 0.0
    %130 = vmatpush1.msra.mxu0 0.0
    %131 = vmatprep.subr.mxu0 0.0
    %132 = vmatpush1.msra.mxu0 0.0
    %133 = vmatprep.subr.mxu0 0.0
    %134 = vmatpush1.msra.mxu0 0.0
    %135 = vmatprep.subr.mxu0 0.0
    %136 = vmatpush1.msra.mxu0 0.0
    %137 = vmatprep.subr.mxu0 0.0
    %138 = vmatpush1.msra.mxu0 0.0
    %139 = vmatprep.subr.mxu0 0.0
    %140 = vmatpush1.msra.mxu0 0.0
    %141 = vmatprep.subr.mxu0 0.0
    %142 = vmatpush1.msra.mxu0 0.0
    %143 = vmatprep.subr.mxu0 0.0
    %144 = vmatpush1.msra.mxu0 0.0
    %145 = vmatprep.subr.mxu0 0.0
    %146 = vmatpush1.msra.mxu0 0.0
    %147 = vmatprep.subr.mxu0 0.0
    %148 = vmatpush1.msra.mxu0 0.0
    %149 = vmatprep.subr.mxu0 0.0
    %150 = vmatpush1.msra.mxu0 0.0
    %151 = vmatprep.subr.mxu0 0.0
    %152 = vmatpush1.msra.mxu0 0.0
    %153 = vmatprep.subr.mxu0 0.0
    %154 = vmatpush1.msra.mxu0 0.0
    %155 = vmatprep.subr.mxu0 0.0
    %156 = vmatpush1.msra.mxu0 0.0
    %157 = vmatprep.subr.mxu0 0.0
    %158 = vmatpush1.msra.mxu0 0.0
    %159 = vmatprep.mubr.f32.mxu0 0.0
    %160 = vmatmul.mubr.f32.gmra.mrb[0].mxu0 %v86
    %v161 = vpop.f32.mrb[0].mxu0
    %v162 = vadd.f32 %v82, %v161
    %v163 = vpop.f32.mrb[0].mxu0
    %164 = vmatprep.mubr.f32.mxu0 0.0
    %165 = vmatmul.mubr.f32.gmra.mrb[0].mxu0 %v89
    %v166 = vpop.f32.mrb[0].mxu0
    %v167 = vadd.f32 %v82, %v166
    %v168 = vpop.f32.mrb[0].mxu0
    %169 = vdwg.mxu0
    %v170 = vand.u32 2147483647, %v162
    %vm171 = vcmp.le.f32.partialorder %v170, 0.7853982
    %vm172 = vcmp.lt.s32.totalorder %v162, 0
    %v173 = vand.u32 %v162, 2139095040
    %v174 = vshrl.u32 %v173, 23
    %v175 = vsub.s32 %v174, 127
    %v176 = vand.u32 2147483647, %v162
    %v177 = vand.u32 %v176, 8388607
    %v178 = vor.u32 %v177, 8388608
    %v179 = vsub.s32 0, %v178
    %v180 = vadd.s32 %v175, 1
    %vm181 = vcmp.gt.s32.totalorder %v180, 0
    %v182 = vsel %vm181, %v180, 0
    %v183 = vshrl.u32 %v182, 5
    %v184 = vand.u32 %v182, 31
    %v185 = vsub.s32 32, %v184
    %v186 = vshrl.u32 683565275, %v185
    %v187 = vshll.u32 683565275, %v184
    %v188 = vshrl.u32 2475754826, %v185
    %v189 = vor.u32 %v187, %v188
    %v190 = vshll.u32 2475754826, %v184
    %v191 = vshrl.u32 2131351028, %v185
    %v192 = vor.u32 %v190, %v191
    %v193 = vshll.u32 2131351028, %v184
    %v194 = vshrl.u32 2102212464, %v185
    %v195 = vor.u32 %v193, %v194
    %v196 = vshll.u32 2102212464, %v184
    %v197 = vshrl.u32 920167782, %v185
    %v198 = vor.u32 %v196, %v197
    %v199 = vshll.u32 920167782, %v184
    %v200 = vshrl.u32 1326507024, %v185
    %v201 = vor.u32 %v199, %v200
    %vm202 = vcmp.lt.s32.totalorder %v183, 1
    %vm203 = vcmp.lt.s32.totalorder %v183, 2
    %vm204 = vcmp.lt.s32.totalorder %v183, 3
    %vm205 = vcmp.lt.s32.totalorder %v183, 4
    %v206 = vsel %vm202, %v186, %v189
    %v207 = vsel %vm205, %v195, 2102212464
    %v208 = vsel %vm204, %v192, %v207
    %v209 = vsel %vm203, %v206, %v208
    %v210 = vsel %vm202, %v189, %v192
    %v211 = vsel %vm205, %v198, 920167782
    %v212 = vsel %vm204, %v195, %v211
    %v213 = vsel %vm203, %v210, %v212
    %v214 = vsel %vm202, %v192, %v195
    %v215 = vsel %vm205, %v201, 1326507024
    %v216 = vsel %vm204, %v198, %v215
    %v217 = vsel %vm203, %v214, %v216
    %v218 = vshll.u32 %v178, 8
    %v219 = vmul.u32.u64.compose %v218, %v217
    %v220 = vextract.low.u32 %v219
    %v221 = vextract.high.u32 %v219
    %v222 = vmul.u32.u64.compose %v218, %v213
    %v223 = vextract.low.u32 %v222
    %v224 = vextract.high.u32 %v222
    %v225 = vmul.u32 %v218, %v209
    %v226 = vadd.s32 %v221, %v223
    %vm227 = vc.u32 %v221, %v223
    %v228 = vadd.s32 %v224, 1
    %v229 = vsel %vm227, %v228, %v224
    %v230 = vadd.s32 %v225, %v229
    %v231 = vadd.s32 %v230, 536870912
    %v232 = vshrl.u32 %v231, 30
    %v233 = vshll.u32 %v232, 30
    %v234 = vsub.s32 %v230, %v233
    %vm235 = vcmp.lt.s32.totalorder %v234, 0
    %v236 = vsub.s32 0, %v234
    %v237 = vsel %vm235, %v236, %v234
    %v238 = vclz %v237
    %v239 = vsub.s32 %v238, 2
    %vm240 = vcmp.gt.s32.totalorder 0, %v239
    %v241 = vsel %vm240, 0, %v239
    %v242 = vsub.s32 32, %v241
    %v243 = vshll.u32 %v234, %v241
    %v244 = vshrl.u32 %v226, %v242
    %v245 = vor.u32 %v243, %v244
    %v246 = vsub.s32 4294967266, %v241
    %v247 = vadd.s32 %v246, 127
    %v248 = vshll.u32 %v247, 23
    %v249 = vor.u32 4788187, %v248
    %v250 = vand.u32 2147483647, %v249
    %v252 = vcvt.s32.f32 %v245
    %v253 = vmul.f32 %v252, %v250
    %v254 = vxor.u32 %v253, 2147483648
    %v255 = vsel %vm172, %v254, %v253
    %v256 = vsub.s32 4, %v232
    %v257 = vsel %vm172, %v256, %v232
    %v258 = vsel %vm171, %v162, %v255
    %v259 = vsel %vm171, 0, %v257
    %v260 = vcosq.f32.pop %v258
    %v261 = vsinq.f32.pop %v258
    %vm262 = vweird.f32 %v162
    %v263 = vadd.s32 %v259, 3
    %v264 = vand.u32 %v263, 3
    %vm265 = vcmp.lt.s32.totalorder %v264, 2
    %vm266 = vcmp.eq.s32.totalorder %v264, 0
    %v267 = vxor.u32 %v261, 2147483648
    %v268 = vsel %vm266, %v260, %v267
    %vm269 = vcmp.eq.s32.totalorder %v264, 2
    %v270 = vxor.u32 %v260, 2147483648
    %v271 = vsel %vm269, %v270, %v261
    %v272 = vsel %vm265, %v268, %v271
    %v273 = vsel %vm262, nan, %v272
    %v274 = vand.u32 2147483647, %v167
    %vm275 = vcmp.le.f32.partialorder %v274, 0.7853982
    %vm276 = vcmp.lt.s32.totalorder %v167, 0
    %v277 = vand.u32 %v167, 2139095040
    %v278 = vshrl.u32 %v277, 23
    %v279 = vsub.s32 %v278, 127
    %v280 = vand.u32 2147483647, %v167
    %v281 = vand.u32 %v280, 8388607
    %v282 = vor.u32 %v281, 8388608
    %v283 = vsub.s32 0, %v282
    %v284 = vadd.s32 %v279, 1
    %vm285 = vcmp.gt.s32.totalorder %v284, 0
    %v286 = vsel %vm285, %v284, 0
    %v287 = vshrl.u32 %v286, 5
    %v288 = vand.u32 %v286, 31
    %v289 = vsub.s32 32, %v288
    %v290 = vshrl.u32 683565275, %v289
    %v291 = vshll.u32 683565275, %v288
    %v292 = vshrl.u32 2475754826, %v289
    %v293 = vor.u32 %v291, %v292
    %v294 = vshll.u32 2475754826, %v288
    %v295 = vshrl.u32 2131351028, %v289
    %v296 = vor.u32 %v294, %v295
    %v297 = vshll.u32 2131351028, %v288
    %v298 = vshrl.u32 2102212464, %v289
    %v299 = vor.u32 %v297, %v298
    %v300 = vshll.u32 2102212464, %v288
    %v301 = vshrl.u32 920167782, %v289
    %v302 = vor.u32 %v300, %v301
    %v303 = vshll.u32 920167782, %v288
    %v304 = vshrl.u32 1326507024, %v289
    %v305 = vor.u32 %v303, %v304
    %vm306 = vcmp.lt.s32.totalorder %v287, 1
    %vm307 = vcmp.lt.s32.totalorder %v287, 2
    %vm308 = vcmp.lt.s32.totalorder %v287, 3
    %vm309 = vcmp.lt.s32.totalorder %v287, 4
    %v310 = vsel %vm306, %v290, %v293
    %v311 = vsel %vm309, %v299, 2102212464
    %v312 = vsel %vm308, %v296, %v311
    %v313 = vsel %vm307, %v310, %v312
    %v314 = vsel %vm306, %v293, %v296
    %v315 = vsel %vm309, %v302, 920167782
    %v316 = vsel %vm308, %v299, %v315
    %v317 = vsel %vm307, %v314, %v316
    %v318 = vsel %vm306, %v296, %v299
    %v319 = vsel %vm309, %v305, 1326507024
    %v320 = vsel %vm308, %v302, %v319
    %v321 = vsel %vm307, %v318, %v320
    %v322 = vshll.u32 %v282, 8
    %v323 = vmul.u32.u64.compose %v322, %v321
    %v324 = vextract.low.u32 %v323
    %v325 = vextract.high.u32 %v323
    %v326 = vmul.u32.u64.compose %v322, %v317
    %v327 = vextract.low.u32 %v326
    %v328 = vextract.high.u32 %v326
    %v329 = vmul.u32 %v322, %v313
    %v330 = vadd.s32 %v325, %v327
    %vm331 = vc.u32 %v325, %v327
    %v332 = vadd.s32 %v328, 1
    %v333 = vsel %vm331, %v332, %v328
    %v334 = vadd.s32 %v329, %v333
    %v335 = vadd.s32 %v334, 536870912
    %v336 = vshrl.u32 %v335, 30
    %v337 = vshll.u32 %v336, 30
    %v338 = vsub.s32 %v334, %v337
    %vm339 = vcmp.lt.s32.totalorder %v338, 0
    %v340 = vsub.s32 0, %v338
    %v341 = vsel %vm339, %v340, %v338
    %v342 = vclz %v341
    %v343 = vsub.s32 %v342, 2
    %vm344 = vcmp.gt.s32.totalorder 0, %v343
    %v345 = vsel %vm344, 0, %v343
    %v346 = vsub.s32 32, %v345
    %v347 = vshll.u32 %v338, %v345
    %v348 = vshrl.u32 %v330, %v346
    %v349 = vor.u32 %v347, %v348
    %v350 = vsub.s32 4294967266, %v345
    %v351 = vadd.s32 %v350, 127
    %v352 = vshll.u32 %v351, 23
    %v353 = vor.u32 4788187, %v352
    %v354 = vand.u32 2147483647, %v353
    %v356 = vcvt.s32.f32 %v349
    %v357 = vmul.f32 %v356, %v354
    %v358 = vxor.u32 %v357, 2147483648
    %v359 = vsel %vm276, %v358, %v357
    %v360 = vsub.s32 4, %v336
    %v361 = vsel %vm276, %v360, %v336
    %v362 = vsel %vm275, %v167, %v359
    %v363 = vsel %vm275, 0, %v361
    %v364 = vcosq.f32.pop %v362
    %v365 = vsinq.f32.pop %v362
    %vm366 = vweird.f32 %v167
    %v367 = vadd.s32 %v363, 3
    %v368 = vand.u32 %v367, 3
    %vm369 = vcmp.lt.s32.totalorder %v368, 2
    %vm370 = vcmp.eq.s32.totalorder %v368, 0
    %v371 = vxor.u32 %v365, 2147483648
    %v372 = vsel %vm370, %v364, %v371
    %vm373 = vcmp.eq.s32.totalorder %v368, 2
    %v374 = vxor.u32 %v364, 2147483648
    %v375 = vsel %vm373, %v374, %v365
    %v376 = vsel %vm369, %v372, %v375
    %v377 = vsel %vm366, nan, %v376
    %v378 = vld [vmem:[%s3] sm:$0xf]
    %v379 = vld [vmem:[#allocation3] sm:$0x1]
    %v381 = vlaneseq
    %v382 = vshrl.u32 %v381, 7
    %v383 = vsub.s32 0, %v382
    %v384 = vrot.slane %v379, %v383
    %v387 = vsel %vm91, %v378, 0
    %389 = vmatprep.subr.mxu0 0.0
    %390 = vmatpush1.msra.mxu0 %v387
    %391 = vmatprep.subr.mxu0 0.0
    %392 = vmatpush1.msra.mxu0 0.0
    %393 = vmatprep.subr.mxu0 0.0
    %394 = vmatpush1.msra.mxu0 0.0
    %395 = vmatprep.subr.mxu0 0.0
    %396 = vmatpush1.msra.mxu0 0.0
    %397 = vmatprep.subr.mxu0 0.0
    %398 = vmatpush1.msra.mxu0 0.0
    %399 = vmatprep.subr.mxu0 0.0
    %400 = vmatpush1.msra.mxu0 0.0
    %401 = vmatprep.subr.mxu0 0.0
    %402 = vmatpush1.msra.mxu0 0.0
    %403 = vmatprep.subr.mxu0 0.0
    %404 = vmatpush1.msra.mxu0 0.0
    %405 = vmatprep.subr.mxu0 0.0
    %406 = vmatpush1.msra.mxu0 0.0
    %407 = vmatprep.subr.mxu0 0.0
    %408 = vmatpush1.msra.mxu0 0.0
    %409 = vmatprep.subr.mxu0 0.0
    %410 = vmatpush1.msra.mxu0 0.0
    %411 = vmatprep.subr.mxu0 0.0
    %412 = vmatpush1.msra.mxu0 0.0
    %413 = vmatprep.subr.mxu0 0.0
    %414 = vmatpush1.msra.mxu0 0.0
    %415 = vmatprep.subr.mxu0 0.0
    %416 = vmatpush1.msra.mxu0 0.0
    %417 = vmatprep.subr.mxu0 0.0
    %418 = vmatpush1.msra.mxu0 0.0
    %419 = vmatprep.subr.mxu0 0.0
    %420 = vmatpush1.msra.mxu0 0.0
    %421 = vmatprep.subr.mxu0 0.0
    %422 = vmatpush1.msra.mxu0 0.0
    %423 = vmatprep.subr.mxu0 0.0
    %424 = vmatpush1.msra.mxu0 0.0
    %425 = vmatprep.subr.mxu0 0.0
    %426 = vmatpush1.msra.mxu0 0.0
    %427 = vmatprep.subr.mxu0 0.0
    %428 = vmatpush1.msra.mxu0 0.0
    %429 = vmatprep.subr.mxu0 0.0
    %430 = vmatpush1.msra.mxu0 0.0
    %431 = vmatprep.subr.mxu0 0.0
    %432 = vmatpush1.msra.mxu0 0.0
    %433 = vmatprep.subr.mxu0 0.0
    %434 = vmatpush1.msra.mxu0 0.0
    %435 = vmatprep.subr.mxu0 0.0
    %436 = vmatpush1.msra.mxu0 0.0
    %437 = vmatprep.subr.mxu0 0.0
    %438 = vmatpush1.msra.mxu0 0.0
    %439 = vmatprep.subr.mxu0 0.0
    %440 = vmatpush1.msra.mxu0 0.0
    %441 = vmatprep.subr.mxu0 0.0
    %442 = vmatpush1.msra.mxu0 0.0
    %443 = vmatprep.subr.mxu0 0.0
    %444 = vmatpush1.msra.mxu0 0.0
    %445 = vmatprep.subr.mxu0 0.0
    %446 = vmatpush1.msra.mxu0 0.0
    %447 = vmatprep.subr.mxu0 0.0
    %448 = vmatpush1.msra.mxu0 0.0
    %449 = vmatprep.subr.mxu0 0.0
    %450 = vmatpush1.msra.mxu0 0.0
    %451 = vmatprep.subr.mxu0 0.0
    %452 = vmatpush1.msra.mxu0 0.0
    %453 = vmatprep.mubr.f32.mxu0 0.0
    %454 = vmatmul.mubr.f32.gmra.mrb[0].mxu0 %v86
    %v455 = vpop.f32.mrb[0].mxu0
    %v456 = vadd.f32 %v384, %v455
    %v457 = vpop.f32.mrb[0].mxu0
    %458 = vmatprep.mubr.f32.mxu0 0.0
    %459 = vmatmul.mubr.f32.gmra.mrb[0].mxu0 %v89
    %v460 = vpop.f32.mrb[0].mxu0
    %v461 = vadd.f32 %v384, %v460
    %v462 = vpop.f32.mrb[0].mxu0
    %463 = vdwg.mxu0
    %v464 = vld [vmem:[%s5] sm:$0xff]
    %v465 = vld [vmem:[%s5 + $0x8] sm:$0x7f]
    %v466 = vld [vmem:[%s6] sm:$0x1]
    %vm467 = vcmask 7168
    %v469 = vsel %vm467, %v456, 0
    %v472 = vsel %vm467, %v461, 0
    %vm474 = vcmask 1040384
    %v476 = vsel %vm474, %v466, 0
    %478 = vmatprep.subr.mxu0 0.0
    %479 = vmatpush1.msra.mxu0 %v476
    %480 = vmatprep.subr.mxu0 0.0
    %481 = vmatpush1.msra.mxu0 0.0
    %482 = vmatprep.subr.mxu0 0.0
    %483 = vmatpush1.msra.mxu0 0.0
    %484 = vmatprep.subr.mxu0 0.0
    %485 = vmatpush1.msra.mxu0 0.0
    %486 = vmatprep.subr.mxu0 0.0
    %487 = vmatpush1.msra.mxu0 0.0
    %488 = vmatprep.subr.mxu0 0.0
    %489 = vmatpush1.msra.mxu0 0.0
    %490 = vmatprep.subr.mxu0 0.0
    %491 = vmatpush1.msra.mxu0 0.0
    %492 = vmatprep.subr.mxu0 0.0
    %493 = vmatpush1.msra.mxu0 0.0
    %494 = vmatprep.subr.mxu0 0.0
    %495 = vmatpush1.msra.mxu0 0.0
    %496 = vmatprep.subr.mxu0 0.0
    %497 = vmatpush1.msra.mxu0 0.0
    %498 = vmatprep.subr.mxu0 0.0
    %499 = vmatpush1.msra.mxu0 0.0
    %500 = vmatprep.subr.mxu0 0.0
    %501 = vmatpush1.msra.mxu0 0.0
    %502 = vmatprep.subr.mxu0 0.0
    %503 = vmatpush1.msra.mxu0 0.0
    %504 = vmatprep.subr.mxu0 0.0
    %505 = vmatpush1.msra.mxu0 0.0
    %506 = vmatprep.subr.mxu0 0.0
    %507 = vmatpush1.msra.mxu0 0.0
    %508 = vmatprep.subr.mxu0 0.0
    %509 = vmatpush1.msra.mxu0 0.0
    %510 = vmatprep.subr.mxu0 0.0
    %511 = vmatpush1.msra.mxu0 0.0
    %512 = vmatprep.subr.mxu0 0.0
    %513 = vmatpush1.msra.mxu0 0.0
    %514 = vmatprep.subr.mxu0 0.0
    %515 = vmatpush1.msra.mxu0 0.0
    %516 = vmatprep.subr.mxu0 0.0
    %517 = vmatpush1.msra.mxu0 0.0
    %518 = vmatprep.subr.mxu0 0.0
    %519 = vmatpush1.msra.mxu0 0.0
    %520 = vmatprep.subr.mxu0 0.0
    %521 = vmatpush1.msra.mxu0 0.0
    %522 = vmatprep.subr.mxu0 0.0
    %523 = vmatpush1.msra.mxu0 0.0
    %524 = vmatprep.subr.mxu0 0.0
    %525 = vmatpush1.msra.mxu0 0.0
    %526 = vmatprep.subr.mxu0 0.0
    %527 = vmatpush1.msra.mxu0 0.0
    %528 = vmatprep.subr.mxu0 0.0
    %529 = vmatpush1.msra.mxu0 0.0
    %530 = vmatprep.subr.mxu0 0.0
    %531 = vmatpush1.msra.mxu0 0.0
    %532 = vmatprep.subr.mxu0 0.0
    %533 = vmatpush1.msra.mxu0 0.0
    %534 = vmatprep.subr.mxu0 0.0
    %535 = vmatpush1.msra.mxu0 0.0
    %536 = vmatprep.subr.mxu0 0.0
    %537 = vmatpush1.msra.mxu0 0.0
    %538 = vmatprep.subr.mxu0 0.0
    %539 = vmatpush1.msra.mxu0 0.0
    %540 = vmatprep.subr.mxu0 0.0
    %541 = vmatpush1.msra.mxu0 0.0
    %542 = vmatprep.mubr.f32.mxu0 0.0
    %543 = vmatmul.mubr.f32.gmra.mrb[0].mxu0 %v469
    %v544 = vpop.f32.mrb[0].mxu0
    %v545 = vadd.f32 0.0, %v544
    %v546 = vpop.f32.mrb[0].mxu0
    %547 = vmatprep.mubr.f32.mxu0 0.0
    %548 = vmatmul.mubr.f32.gmra.mrb[0].mxu0 %v472
    %v549 = vpop.f32.mrb[0].mxu0
    %v550 = vadd.f32 0.0, %v549
    %v551 = vpop.f32.mrb[0].mxu0
    %552 = vdwg.mxu0
    %vm553 = vcmask 121856
    %v555 = vsel %vm553, %v273, 0
    %v558 = vsel %vm553, %v377, 0
    %vm560 = vcmask 1046528
    %v562 = vsel %vm560, %v465, 0
    %564 = vmatprep.subr.mxu0 0.0
    %565 = vmatpush1.msra.mxu0 %v464
    %566 = vmatprep.subr.mxu0 0.0
    %567 = vmatpush1.msra.mxu0 %v562
    %568 = vmatprep.subr.mxu0 0.0
    %569 = vmatpush1.msra.mxu0 0.0
    %570 = vmatprep.subr.mxu0 0.0
    %571 = vmatpush1.msra.mxu0 0.0
    %572 = vmatprep.subr.mxu0 0.0
    %573 = vmatpush1.msra.mxu0 0.0
    %574 = vmatprep.subr.mxu0 0.0
    %575 = vmatpush1.msra.mxu0 0.0
    %576 = vmatprep.subr.mxu0 0.0
    %577 = vmatpush1.msra.mxu0 0.0
    %578 = vmatprep.subr.mxu0 0.0
    %579 = vmatpush1.msra.mxu0 0.0
    %580 = vmatprep.subr.mxu0 0.0
    %581 = vmatpush1.msra.mxu0 0.0
    %582 = vmatprep.subr.mxu0 0.0
    %583 = vmatpush1.msra.mxu0 0.0
    %584 = vmatprep.subr.mxu0 0.0
    %585 = vmatpush1.msra.mxu0 0.0
    %586 = vmatprep.subr.mxu0 0.0
    %587 = vmatpush1.msra.mxu0 0.0
    %588 = vmatprep.subr.mxu0 0.0
    %589 = vmatpush1.msra.mxu0 0.0
    %590 = vmatprep.subr.mxu0 0.0
    %591 = vmatpush1.msra.mxu0 0.0
    %592 = vmatprep.subr.mxu0 0.0
    %593 = vmatpush1.msra.mxu0 0.0
    %594 = vmatprep.subr.mxu0 0.0
    %595 = vmatpush1.msra.mxu0 0.0
    %596 = vmatprep.subr.mxu0 0.0
    %597 = vmatpush1.msra.mxu0 0.0
    %598 = vmatprep.subr.mxu0 0.0
    %599 = vmatpush1.msra.mxu0 0.0
    %600 = vmatprep.subr.mxu0 0.0
    %601 = vmatpush1.msra.mxu0 0.0
    %602 = vmatprep.subr.mxu0 0.0
    %603 = vmatpush1.msra.mxu0 0.0
    %604 = vmatprep.subr.mxu0 0.0
    %605 = vmatpush1.msra.mxu0 0.0
    %606 = vmatprep.subr.mxu0 0.0
    %607 = vmatpush1.msra.mxu0 0.0
    %608 = vmatprep.subr.mxu0 0.0
    %609 = vmatpush1.msra.mxu0 0.0
    %610 = vmatprep.subr.mxu0 0.0
    %611 = vmatpush1.msra.mxu0 0.0
    %612 = vmatprep.subr.mxu0 0.0
    %613 = vmatpush1.msra.mxu0 0.0
    %614 = vmatprep.subr.mxu0 0.0
    %615 = vmatpush1.msra.mxu0 0.0
    %616 = vmatprep.subr.mxu0 0.0
    %617 = vmatpush1.msra.mxu0 0.0
    %618 = vmatprep.subr.mxu0 0.0
    %619 = vmatpush1.msra.mxu0 0.0
    %620 = vmatprep.subr.mxu0 0.0
    %621 = vmatpush1.msra.mxu0 0.0
    %622 = vmatprep.subr.mxu0 0.0
    %623 = vmatpush1.msra.mxu0 0.0
    %624 = vmatprep.subr.mxu0 0.0
    %625 = vmatpush1.msra.mxu0 0.0
    %626 = vmatprep.subr.mxu0 0.0
    %627 = vmatpush1.msra.mxu0 0.0
    %628 = vmatprep.mubr.f32.mxu0 0.0
    %629 = vmatmul.mubr.f32.gmra.mrb[0].mxu0 %v555
    %v630 = vpop.f32.mrb[0].mxu0
    %v631 = vadd.f32 %v545, %v630
    %v632 = vpop.f32.mrb[0].mxu0
    %633 = vmatprep.mubr.f32.mxu0 0.0
    %634 = vmatmul.mubr.f32.gmra.mrb[0].mxu0 %v558
    %v635 = vpop.f32.mrb[0].mxu0
    %v636 = vadd.f32 %v550, %v635
    %v637 = vpop.f32.mrb[0].mxu0
    %638 = vdwg.mxu0
    %v639 = vld [vmem:[%s7] sm:$0x1]
    %v641 = vlaneseq
    %v642 = vshrl.u32 %v641, 7
    %v643 = vsub.s32 0, %v642
    %v644 = vrot.slane %v639, %v643
    %v646 = vadd.f32 %v631, %v644
    %v647 = vadd.f32 %v636, %v644
    %v648 = vld [vmem:[%s8] sm:$0xf]
    %v649 = vld [vmem:[%s9] sm:$0x1]
    %v651 = vlaneseq
    %v652 = vshrl.u32 %v651, 7
    %v653 = vsub.s32 0, %v652
    %v654 = vrot.slane %v649, %v653
    %v657 = vsel %vm84, %v646, 0
    %v660 = vsel %vm84, %v647, 0
    %v663 = vsel %vm91, %v648, 0
    %665 = vmatprep.subr.mxu0 0.0
    %666 = vmatpush1.msra.mxu0 %v663
    %667 = vmatprep.subr.mxu0 0.0
    %668 = vmatpush1.msra.mxu0 0.0
    %669 = vmatprep.subr.mxu0 0.0
    %670 = vmatpush1.msra.mxu0 0.0
    %671 = vmatprep.subr.mxu0 0.0
    %672 = vmatpush1.msra.mxu0 0.0
    %673 = vmatprep.subr.mxu0 0.0
    %674 = vmatpush1.msra.mxu0 0.0
    %675 = vmatprep.subr.mxu0 0.0
    %676 = vmatpush1.msra.mxu0 0.0
    %677 = vmatprep.subr.mxu0 0.0
    %678 = vmatpush1.msra.mxu0 0.0
    %679 = vmatprep.subr.mxu0 0.0
    %680 = vmatpush1.msra.mxu0 0.0
    %681 = vmatprep.subr.mxu0 0.0
    %682 = vmatpush1.msra.mxu0 0.0
    %683 = vmatprep.subr.mxu0 0.0
    %684 = vmatpush1.msra.mxu0 0.0
    %685 = vmatprep.subr.mxu0 0.0
    %686 = vmatpush1.msra.mxu0 0.0
    %687 = vmatprep.subr.mxu0 0.0
    %688 = vmatpush1.msra.mxu0 0.0
    %689 = vmatprep.subr.mxu0 0.0
    %690 = vmatpush1.msra.mxu0 0.0
    %691 = vmatprep.subr.mxu0 0.0
    %692 = vmatpush1.msra.mxu0 0.0
    %693 = vmatprep.subr.mxu0 0.0
    %694 = vmatpush1.msra.mxu0 0.0
    %695 = vmatprep.subr.mxu0 0.0
    %696 = vmatpush1.msra.mxu0 0.0
    %697 = vmatprep.subr.mxu0 0.0
    %698 = vmatpush1.msra.mxu0 0.0
    %699 = vmatprep.subr.mxu0 0.0
    %700 = vmatpush1.msra.mxu0 0.0
    %701 = vmatprep.subr.mxu0 0.0
    %702 = vmatpush1.msra.mxu0 0.0
    %703 = vmatprep.subr.mxu0 0.0
    %704 = vmatpush1.msra.mxu0 0.0
    %705 = vmatprep.subr.mxu0 0.0
    %706 = vmatpush1.msra.mxu0 0.0
    %707 = vmatprep.subr.mxu0 0.0
    %708 = vmatpush1.msra.mxu0 0.0
    %709 = vmatprep.subr.mxu0 0.0
    %710 = vmatpush1.msra.mxu0 0.0
    %711 = vmatprep.subr.mxu0 0.0
    %712 = vmatpush1.msra.mxu0 0.0
    %713 = vmatprep.subr.mxu0 0.0
    %714 = vmatpush1.msra.mxu0 0.0
    %715 = vmatprep.subr.mxu0 0.0
    %716 = vmatpush1.msra.mxu0 0.0
    %717 = vmatprep.subr.mxu0 0.0
    %718 = vmatpush1.msra.mxu0 0.0
    %719 = vmatprep.subr.mxu0 0.0
    %720 = vmatpush1.msra.mxu0 0.0
    %721 = vmatprep.subr.mxu0 0.0
    %722 = vmatpush1.msra.mxu0 0.0
    %723 = vmatprep.subr.mxu0 0.0
    %724 = vmatpush1.msra.mxu0 0.0
    %725 = vmatprep.subr.mxu0 0.0
    %726 = vmatpush1.msra.mxu0 0.0
    %727 = vmatprep.subr.mxu0 0.0
    %728 = vmatpush1.msra.mxu0 0.0
    %729 = vmatprep.mubr.f32.mxu0 0.0
    %730 = vmatmul.mubr.f32.gmra.mrb[0].mxu0 %v657
    %v731 = vpop.f32.mrb[0].mxu0
    %v732 = vadd.f32 %v654, %v731
    %v733 = vpop.f32.mrb[0].mxu0
    %734 = vmatprep.mubr.f32.mxu0 0.0
    %735 = vmatmul.mubr.f32.gmra.mrb[0].mxu0 %v660
    %v736 = vpop.f32.mrb[0].mxu0
    %v737 = vadd.f32 %v654, %v736
    %v738 = vpop.f32.mrb[0].mxu0
    %739 = vdwg.mxu0
    %vm740 = vcmask 785408
    %741 = vst.msk [vmem:[#allocation2] sm:$0xff] %vm740, %v732
    %742 = vst.msk [vmem:[#allocation2 + $0x8] sm:$0xff] %vm740, %v737
    %v743 = vld [vmem:[%s10] sm:$0xff]
    %v744 = vld [vmem:[%s10 + $0x8] sm:$0xff]
    %v745 = vld [vmem:[%s10 + $0x10] sm:$0xff]
    %v746 = vld [vmem:[%s10 + $0x18] sm:$0xff]
    %v747 = vld [vmem:[%s11] sm:$0x1]
    %v748 = vld [vmem:[#allocation2] sm:$0x3]
    %vm749 = vcmask 261120
    %v751 = vsel %vm749, 0.0, 0
    %753 = vmatprep.subr.mxu0 0.0
    %754 = vmatpush1.msra.mxu0 %v743
    %755 = vmatprep.subr.mxu0 0.0
    %756 = vmatpush1.msra.mxu0 %v744
    %757 = vmatprep.subr.mxu0 0.0
    %758 = vmatpush1.msra.mxu0 %v745
    %759 = vmatprep.subr.mxu0 0.0
    %760 = vmatpush1.msra.mxu0 %v746
    %761 = vmatprep.subr.mxu0 0.0
    %762 = vmatpush1.msra.mxu0 0.0
    %763 = vmatprep.subr.mxu0 0.0
    %764 = vmatpush1.msra.mxu0 0.0
    %765 = vmatprep.subr.mxu0 0.0
    %766 = vmatpush1.msra.mxu0 0.0
    %767 = vmatprep.subr.mxu0 0.0
    %768 = vmatpush1.msra.mxu0 0.0
    %769 = vmatprep.subr.mxu0 0.0
    %770 = vmatpush1.msra.mxu0 0.0
    %771 = vmatprep.subr.mxu0 0.0
    %772 = vmatpush1.msra.mxu0 0.0
    %773 = vmatprep.subr.mxu0 0.0
    %774 = vmatpush1.msra.mxu0 0.0
    %775 = vmatprep.subr.mxu0 0.0
    %776 = vmatpush1.msra.mxu0 0.0
    %777 = vmatprep.subr.mxu0 0.0
    %778 = vmatpush1.msra.mxu0 0.0
    %779 = vmatprep.subr.mxu0 0.0
    %780 = vmatpush1.msra.mxu0 0.0
    %781 = vmatprep.subr.mxu0 0.0
    %782 = vmatpush1.msra.mxu0 0.0
    %783 = vmatprep.subr.mxu0 0.0
    %784 = vmatpush1.msra.mxu0 0.0
    %785 = vmatprep.subr.mxu0 0.0
    %786 = vmatpush1.msra.mxu0 0.0
    %787 = vmatprep.subr.mxu0 0.0
    %788 = vmatpush1.msra.mxu0 0.0
    %789 = vmatprep.subr.mxu0 0.0
    %790 = vmatpush1.msra.mxu0 0.0
    %791 = vmatprep.subr.mxu0 0.0
    %792 = vmatpush1.msra.mxu0 0.0
    %793 = vmatprep.subr.mxu0 0.0
    %794 = vmatpush1.msra.mxu0 0.0
    %795 = vmatprep.subr.mxu0 0.0
    %796 = vmatpush1.msra.mxu0 0.0
    %797 = vmatprep.subr.mxu0 0.0
    %798 = vmatpush1.msra.mxu0 0.0
    %799 = vmatprep.subr.mxu0 0.0
    %800 = vmatpush1.msra.mxu0 0.0
    %801 = vmatprep.subr.mxu0 0.0
    %802 = vmatpush1.msra.mxu0 0.0
    %803 = vmatprep.subr.mxu0 0.0
    %804 = vmatpush1.msra.mxu0 0.0
    %805 = vmatprep.subr.mxu0 0.0
    %806 = vmatpush1.msra.mxu0 0.0
    %807 = vmatprep.subr.mxu0 0.0
    %808 = vmatpush1.msra.mxu0 0.0
    %809 = vmatprep.subr.mxu0 0.0
    %810 = vmatpush1.msra.mxu0 0.0
    %811 = vmatprep.subr.mxu0 0.0
    %812 = vmatpush1.msra.mxu0 0.0
    %813 = vmatprep.subr.mxu0 0.0
    %814 = vmatpush1.msra.mxu0 0.0
    %815 = vmatprep.subr.mxu0 0.0
    %816 = vmatpush1.msra.mxu0 0.0
    %817 = vmatprep.mubr.f32.mxu0 0.0
    %818 = vmatmul.mubr.f32.gmra.mrb[0].mxu0 %v751
    %v819 = vpop.f32.mrb[0].mxu0
    %v820 = vadd.f32 0.0, %v819
    %v821 = vpop.f32.mrb[0].mxu0
    %822 = vdwg.mxu0
    %v823 = vadd.f32 %v748, %v820
    %v824 = vxor.u32 %v823, 2147483648
    %v825 = vmul.f32 %v824, 1.442695
    %v826 = vpow.pop %v825
    %v827 = vadd.f32 %v826, 1.0
    %v828 = vrcp.pop %v827
    %v829 = vmul.f32 1.0, %v828
    %v831 = vlaneseq
    %v832 = vshrl.u32 %v831, 7
    %v833 = vsub.s32 0, %v832
    %v834 = vrot.slane %v747, %v833
    %835 = vrot.lane.b32.xlu0 %v834, 64
    %v836 = vpop.permute.xlu0 %835
    %v838 = vadd.f32 %v820, %v836
    %840 = vrot.lane.b32.xlu0 %v838, 64
    %v841 = vpop.permute.xlu0 %840
    %v843 = vmul.f32 %v829, %v841
    %845 = vrot.lane.b32.xlu0 %v843, 64
    %v846 = vpop.permute.xlu0 %845
    %v848 = vadd.f32 %v748, %v846
    %v849 = vtanh.pop %v848
    %v850 = vsub.f32 1.0, %v829
    %852 = vrot.lane.b32.xlu0 %v849, 96
    %v853 = vpop.permute.xlu0 %852
    %v855 = vmul.f32 %v850, %v853
    %v856 = vmul.f32 %v829, 0.0
    %v857 = vadd.f32 %v855, %v856
    %v858 = vld [vmem:[#allocation2 + $0x2] sm:$0x3]
    %860 = vrot.lane.b32.xlu0 %v857, 96
    %v861 = vpop.permute.xlu0 %860
    %v862 = vsel %vm749, %v861, 0
    %864 = vmatprep.subr.mxu0 0.0
    %865 = vmatpush1.msra.mxu0 %v743
    %866 = vmatprep.subr.mxu0 0.0
    %867 = vmatpush1.msra.mxu0 %v744
    %868 = vmatprep.subr.mxu0 0.0
    %869 = vmatpush1.msra.mxu0 %v745
    %870 = vmatprep.subr.mxu0 0.0
    %871 = vmatpush1.msra.mxu0 %v746
    %872 = vmatprep.subr.mxu0 0.0
    %873 = vmatpush1.msra.mxu0 0.0
    %874 = vmatprep.subr.mxu0 0.0
    %875 = vmatpush1.msra.mxu0 0.0
    %876 = vmatprep.subr.mxu0 0.0
    %877 = vmatpush1.msra.mxu0 0.0
    %878 = vmatprep.subr.mxu0 0.0
    %879 = vmatpush1.msra.mxu0 0.0
    %880 = vmatprep.subr.mxu0 0.0
    %881 = vmatpush1.msra.mxu0 0.0
    %882 = vmatprep.subr.mxu0 0.0
    %883 = vmatpush1.msra.mxu0 0.0
    %884 = vmatprep.subr.mxu0 0.0
    %885 = vmatpush1.msra.mxu0 0.0
    %886 = vmatprep.subr.mxu0 0.0
    %887 = vmatpush1.msra.mxu0 0.0
    %888 = vmatprep.subr.mxu0 0.0
    %889 = vmatpush1.msra.mxu0 0.0
    %890 = vmatprep.subr.mxu0 0.0
    %891 = vmatpush1.msra.mxu0 0.0
    %892 = vmatprep.subr.mxu0 0.0
    %893 = vmatpush1.msra.mxu0 0.0
    %894 = vmatprep.subr.mxu0 0.0
    %895 = vmatpush1.msra.mxu0 0.0
    %896 = vmatprep.subr.mxu0 0.0
    %897 = vmatpush1.msra.mxu0 0.0
    %898 = vmatprep.subr.mxu0 0.0
    %899 = vmatpush1.msra.mxu0 0.0
    %900 = vmatprep.subr.mxu0 0.0
    %901 = vmatpush1.msra.mxu0 0.0
    %902 = vmatprep.subr.mxu0 0.0
    %903 = vmatpush1.msra.mxu0 0.0
    %904 = vmatprep.subr.mxu0 0.0
    %905 = vmatpush1.msra.mxu0 0.0
    %906 = vmatprep.subr.mxu0 0.0
    %907 = vmatpush1.msra.mxu0 0.0
    %908 = vmatprep.subr.mxu0 0.0
    %909 = vmatpush1.msra.mxu0 0.0
    %910 = vmatprep.subr.mxu0 0.0
    %911 = vmatpush1.msra.mxu0 0.0
    %912 = vmatprep.subr.mxu0 0.0
    %913 = vmatpush1.msra.mxu0 0.0
    %914 = vmatprep.subr.mxu0 0.0
    %915 = vmatpush1.msra.mxu0 0.0
    %916 = vmatprep.subr.mxu0 0.0
    %917 = vmatpush1.msra.mxu0 0.0
    %918 = vmatprep.subr.mxu0 0.0
    %919 = vmatpush1.msra.mxu0 0.0
    %920 = vmatprep.subr.mxu0 0.0
    %921 = vmatpush1.msra.mxu0 0.0
    %922 = vmatprep.subr.mxu0 0.0
    %923 = vmatpush1.msra.mxu0 0.0
    %924 = vmatprep.subr.mxu0 0.0
    %925 = vmatpush1.msra.mxu0 0.0
    %926 = vmatprep.subr.mxu0 0.0
    %927 = vmatpush1.msra.mxu0 0.0
    %928 = vmatprep.mubr.f32.mxu0 0.0
    %929 = vmatmul.mubr.f32.gmra.mrb[0].mxu0 %v862
    %v930 = vpop.f32.mrb[0].mxu0
    %v931 = vadd.f32 0.0, %v930
    %v932 = vpop.f32.mrb[0].mxu0
    %933 = vdwg.mxu0
    %v934 = vadd.f32 %v858, %v931
    %v935 = vxor.u32 %v934, 2147483648
    %v936 = vmul.f32 %v935, 1.442695
    %v937 = vpow.pop %v936
    %v938 = vadd.f32 %v937, 1.0
    %v939 = vrcp.pop %v938
    %v940 = vmul.f32 1.0, %v939
    %v941 = vadd.f32 %v931, %v836
    %943 = vrot.lane.b32.xlu0 %v941, 64
    %v944 = vpop.permute.xlu0 %943
    %v946 = vmul.f32 %v940, %v944
    %948 = vrot.lane.b32.xlu0 %v946, 64
    %v949 = vpop.permute.xlu0 %948
    %v951 = vadd.f32 %v858, %v949
    %v952 = vtanh.pop %v951
    %v953 = vsub.f32 1.0, %v940
    %955 = vrot.lane.b32.xlu0 %v952, 96
    %v956 = vpop.permute.xlu0 %955
    %v958 = vmul.f32 %v953, %v956
    %v959 = vmul.f32 %v940, %v857
    %v960 = vadd.f32 %v958, %v959
    %v961 = vld [vmem:[#allocation2 + $0x4] sm:$0x3]
    %963 = vrot.lane.b32.xlu0 %v960, 96
    %v964 = vpop.permute.xlu0 %963
    %v965 = vsel %vm749, %v964, 0
    %967 = vmatprep.subr.mxu0 0.0
    %968 = vmatpush1.msra.mxu0 %v743
    %969 = vmatprep.subr.mxu0 0.0
    %970 = vmatpush1.msra.mxu0 %v744
    %971 = vmatprep.subr.mxu0 0.0
    %972 = vmatpush1.msra.mxu0 %v745
    %973 = vmatprep.subr.mxu0 0.0
    %974 = vmatpush1.msra.mxu0 %v746
    %975 = vmatprep.subr.mxu0 0.0
    %976 = vmatpush1.msra.mxu0 0.0
    %977 = vmatprep.subr.mxu0 0.0
    %978 = vmatpush1.msra.mxu0 0.0
    %979 = vmatprep.subr.mxu0 0.0
    %980 = vmatpush1.msra.mxu0 0.0
    %981 = vmatprep.subr.mxu0 0.0
    %982 = vmatpush1.msra.mxu0 0.0
    %983 = vmatprep.subr.mxu0 0.0
    %984 = vmatpush1.msra.mxu0 0.0
    %985 = vmatprep.subr.mxu0 0.0
    %986 = vmatpush1.msra.mxu0 0.0
    %987 = vmatprep.subr.mxu0 0.0
    %988 = vmatpush1.msra.mxu0 0.0
    %989 = vmatprep.subr.mxu0 0.0
    %990 = vmatpush1.msra.mxu0 0.0
    %991 = vmatprep.subr.mxu0 0.0
    %992 = vmatpush1.msra.mxu0 0.0
    %993 = vmatprep.subr.mxu0 0.0
    %994 = vmatpush1.msra.mxu0 0.0
    %995 = vmatprep.subr.mxu0 0.0
    %996 = vmatpush1.msra.mxu0 0.0
    %997 = vmatprep.subr.mxu0 0.0
    %998 = vmatpush1.msra.mxu0 0.0
    %999 = vmatprep.subr.mxu0 0.0
    %1000 = vmatpush1.msra.mxu0 0.0
    %1001 = vmatprep.subr.mxu0 0.0
    %1002 = vmatpush1.msra.mxu0 0.0
    %1003 = vmatprep.subr.mxu0 0.0
    %1004 = vmatpush1.msra.mxu0 0.0
    %1005 = vmatprep.subr.mxu0 0.0
    %1006 = vmatpush1.msra.mxu0 0.0
    %1007 = vmatprep.subr.mxu0 0.0
    %1008 = vmatpush1.msra.mxu0 0.0
    %1009 = vmatprep.subr.mxu0 0.0
    %1010 = vmatpush1.msra.mxu0 0.0
    %1011 = vmatprep.subr.mxu0 0.0
    %1012 = vmatpush1.msra.mxu0 0.0
    %1013 = vmatprep.subr.mxu0 0.0
    %1014 = vmatpush1.msra.mxu0 0.0
    %1015 = vmatprep.subr.mxu0 0.0
    %1016 = vmatpush1.msra.mxu0 0.0
    %1017 = vmatprep.subr.mxu0 0.0
    %1018 = vmatpush1.msra.mxu0 0.0
    %1019 = vmatprep.subr.mxu0 0.0
    %1020 = vmatpush1.msra.mxu0 0.0
    %1021 = vmatprep.subr.mxu0 0.0
    %1022 = vmatpush1.msra.mxu0 0.0
    %1023 = vmatprep.subr.mxu0 0.0
    %1024 = vmatpush1.msra.mxu0 0.0
    %1025 = vmatprep.subr.mxu0 0.0
    %1026 = vmatpush1.msra.mxu0 0.0
    %1027 = vmatprep.subr.mxu0 0.0
    %1028 = vmatpush1.msra.mxu0 0.0
    %1029 = vmatprep.subr.mxu0 0.0
    %1030 = vmatpush1.msra.mxu0 0.0
    %1031 = vmatprep.mubr.f32.mxu0 0.0
    %1032 = vmatmul.mubr.f32.gmra.mrb[0].mxu0 %v965
    %v1033 = vpop.f32.mrb[0].mxu0
    %v1034 = vadd.f32 0.0, %v1033
    %v1035 = vpop.f32.mrb[0].mxu0
    %1036 = vdwg.mxu0
    %v1037 = vadd.f32 %v961, %v1034
    %v1038 = vxor.u32 %v1037, 2147483648
    %v1039 = vmul.f32 %v1038, 1.442695
    %v1040 = vpow.pop %v1039
    %v1041 = vadd.f32 %v1040, 1.0
    %v1042 = vrcp.pop %v1041
    %v1043 = vmul.f32 1.0, %v1042
    %v1044 = vadd.f32 %v1034, %v836
    %1046 = vrot.lane.b32.xlu0 %v1044, 64
    %v1047 = vpop.permute.xlu0 %1046
    %v1049 = vmul.f32 %v1043, %v1047
    %1051 = vrot.lane.b32.xlu0 %v1049, 64
    %v1052 = vpop.permute.xlu0 %1051
    %v1054 = vadd.f32 %v961, %v1052
    %v1055 = vtanh.pop %v1054
    %v1056 = vsub.f32 1.0, %v1043
    %1058 = vrot.lane.b32.xlu0 %v1055, 96
    %v1059 = vpop.permute.xlu0 %1058
    %v1061 = vmul.f32 %v1056, %v1059
    %v1062 = vmul.f32 %v1043, %v960
    %v1063 = vadd.f32 %v1061, %v1062
    %v1064 = vld [vmem:[#allocation2 + $0x6] sm:$0x3]
    %1066 = vrot.lane.b32.xlu0 %v1063, 96
    %v1067 = vpop.permute.xlu0 %1066
    %v1068 = vsel %vm749, %v1067, 0
    %1070 = vmatprep.subr.mxu0 0.0
    %1071 = vmatpush1.msra.mxu0 %v743
    %1072 = vmatprep.subr.mxu0 0.0
    %1073 = vmatpush1.msra.mxu0 %v744
    %1074 = vmatprep.subr.mxu0 0.0
    %1075 = vmatpush1.msra.mxu0 %v745
    %1076 = vmatprep.subr.mxu0 0.0
    %1077 = vmatpush1.msra.mxu0 %v746
    %1078 = vmatprep.subr.mxu0 0.0
    %1079 = vmatpush1.msra.mxu0 0.0
    %1080 = vmatprep.subr.mxu0 0.0
    %1081 = vmatpush1.msra.mxu0 0.0
    %1082 = vmatprep.subr.mxu0 0.0
    %1083 = vmatpush1.msra.mxu0 0.0
    %1084 = vmatprep.subr.mxu0 0.0
    %1085 = vmatpush1.msra.mxu0 0.0
    %1086 = vmatprep.subr.mxu0 0.0
    %1087 = vmatpush1.msra.mxu0 0.0
    %1088 = vmatprep.subr.mxu0 0.0
    %1089 = vmatpush1.msra.mxu0 0.0
    %1090 = vmatprep.subr.mxu0 0.0
    %1091 = vmatpush1.msra.mxu0 0.0
    %1092 = vmatprep.subr.mxu0 0.0
    %1093 = vmatpush1.msra.mxu0 0.0
    %1094 = vmatprep.subr.mxu0 0.0
    %1095 = vmatpush1.msra.mxu0 0.0
    %1096 = vmatprep.subr.mxu0 0.0
    %1097 = vmatpush1.msra.mxu0 0.0
    %1098 = vmatprep.subr.mxu0 0.0
    %1099 = vmatpush1.msra.mxu0 0.0
    %1100 = vmatprep.subr.mxu0 0.0
    %1101 = vmatpush1.msra.mxu0 0.0
    %1102 = vmatprep.subr.mxu0 0.0
    %1103 = vmatpush1.msra.mxu0 0.0
    %1104 = vmatprep.subr.mxu0 0.0
    %1105 = vmatpush1.msra.mxu0 0.0
    %1106 = vmatprep.subr.mxu0 0.0
    %1107 = vmatpush1.msra.mxu0 0.0
    %1108 = vmatprep.subr.mxu0 0.0
    %1109 = vmatpush1.msra.mxu0 0.0
    %1110 = vmatprep.subr.mxu0 0.0
    %1111 = vmatpush1.msra.mxu0 0.0
    %1112 = vmatprep.subr.mxu0 0.0
    %1113 = vmatpush1.msra.mxu0 0.0
    %1114 = vmatprep.subr.mxu0 0.0
    %1115 = vmatpush1.msra.mxu0 0.0
    %1116 = vmatprep.subr.mxu0 0.0
    %1117 = vmatpush1.msra.mxu0 0.0
    %1118 = vmatprep.subr.mxu0 0.0
    %1119 = vmatpush1.msra.mxu0 0.0
    %1120 = vmatprep.subr.mxu0 0.0
    %1121 = vmatpush1.msra.mxu0 0.0
    %1122 = vmatprep.subr.mxu0 0.0
    %1123 = vmatpush1.msra.mxu0 0.0
    %1124 = vmatprep.subr.mxu0 0.0
    %1125 = vmatpush1.msra.mxu0 0.0
    %1126 = vmatprep.subr.mxu0 0.0
    %1127 = vmatpush1.msra.mxu0 0.0
    %1128 = vmatprep.subr.mxu0 0.0
    %1129 = vmatpush1.msra.mxu0 0.0
    %1130 = vmatprep.subr.mxu0 0.0
    %1131 = vmatpush1.msra.mxu0 0.0
    %1132 = vmatprep.subr.mxu0 0.0
    %1133 = vmatpush1.msra.mxu0 0.0
    %1134 = vmatprep.mubr.f32.mxu0 0.0
    %1135 = vmatmul.mubr.f32.gmra.mrb[0].mxu0 %v1068
    %v1136 = vpop.f32.mrb[0].mxu0
    %v1137 = vadd.f32 0.0, %v1136
    %v1138 = vpop.f32.mrb[0].mxu0
    %1139 = vdwg.mxu0
    %v1140 = vadd.f32 %v1064, %v1137
    %v1141 = vxor.u32 %v1140, 2147483648
    %v1142 = vmul.f32 %v1141, 1.442695
    %v1143 = vpow.pop %v1142
    %v1144 = vadd.f32 %v1143, 1.0
    %v1145 = vrcp.pop %v1144
    %v1146 = vmul.f32 1.0, %v1145
    %v1147 = vadd.f32 %v1137, %v836
    %1149 = vrot.lane.b32.xlu0 %v1147, 64
    %v1150 = vpop.permute.xlu0 %1149
    %v1152 = vmul.f32 %v1146, %v1150
    %1154 = vrot.lane.b32.xlu0 %v1152, 64
    %v1155 = vpop.permute.xlu0 %1154
    %v1157 = vadd.f32 %v1064, %v1155
    %v1158 = vtanh.pop %v1157
    %v1159 = vsub.f32 1.0, %v1146
    %1161 = vrot.lane.b32.xlu0 %v1158, 96
    %v1162 = vpop.permute.xlu0 %1161
    %v1164 = vmul.f32 %v1159, %v1162
    %v1165 = vmul.f32 %v1146, %v1063
    %v1166 = vadd.f32 %v1164, %v1165
    %v1167 = vld [vmem:[#allocation2 + $0x8] sm:$0x3]
    %1169 = vrot.lane.b32.xlu0 %v1166, 96
    %v1170 = vpop.permute.xlu0 %1169
    %v1171 = vsel %vm749, %v1170, 0
    %1173 = vmatprep.subr.mxu0 0.0
    %1174 = vmatpush1.msra.mxu0 %v743
    %1175 = vmatprep.subr.mxu0 0.0
    %1176 = vmatpush1.msra.mxu0 %v744
    %1177 = vmatprep.subr.mxu0 0.0
    %1178 = vmatpush1.msra.mxu0 %v745
    %1179 = vmatprep.subr.mxu0 0.0
    %1180 = vmatpush1.msra.mxu0 %v746
    %1181 = vmatprep.subr.mxu0 0.0
    %1182 = vmatpush1.msra.mxu0 0.0
    %1183 = vmatprep.subr.mxu0 0.0
    %1184 = vmatpush1.msra.mxu0 0.0
    %1185 = vmatprep.subr.mxu0 0.0
    %1186 = vmatpush1.msra.mxu0 0.0
    %1187 = vmatprep.subr.mxu0 0.0
    %1188 = vmatpush1.msra.mxu0 0.0
    %1189 = vmatprep.subr.mxu0 0.0
    %1190 = vmatpush1.msra.mxu0 0.0
    %1191 = vmatprep.subr.mxu0 0.0
    %1192 = vmatpush1.msra.mxu0 0.0
    %1193 = vmatprep.subr.mxu0 0.0
    %1194 = vmatpush1.msra.mxu0 0.0
    %1195 = vmatprep.subr.mxu0 0.0
    %1196 = vmatpush1.msra.mxu0 0.0
    %1197 = vmatprep.subr.mxu0 0.0
    %1198 = vmatpush1.msra.mxu0 0.0
    %1199 = vmatprep.subr.mxu0 0.0
    %1200 = vmatpush1.msra.mxu0 0.0
    %1201 = vmatprep.subr.mxu0 0.0
    %1202 = vmatpush1.msra.mxu0 0.0
    %1203 = vmatprep.subr.mxu0 0.0
    %1204 = vmatpush1.msra.mxu0 0.0
    %1205 = vmatprep.subr.mxu0 0.0
    %1206 = vmatpush1.msra.mxu0 0.0
    %1207 = vmatprep.subr.mxu0 0.0
    %1208 = vmatpush1.msra.mxu0 0.0
    %1209 = vmatprep.subr.mxu0 0.0
    %1210 = vmatpush1.msra.mxu0 0.0
    %1211 = vmatprep.subr.mxu0 0.0
    %1212 = vmatpush1.msra.mxu0 0.0
    %1213 = vmatprep.subr.mxu0 0.0
    %1214 = vmatpush1.msra.mxu0 0.0
    %1215 = vmatprep.subr.mxu0 0.0
    %1216 = vmatpush1.msra.mxu0 0.0
    %1217 = vmatprep.subr.mxu0 0.0
    %1218 = vmatpush1.msra.mxu0 0.0
    %1219 = vmatprep.subr.mxu0 0.0
    %1220 = vmatpush1.msra.mxu0 0.0
    %1221 = vmatprep.subr.mxu0 0.0
    %1222 = vmatpush1.msra.mxu0 0.0
    %1223 = vmatprep.subr.mxu0 0.0
    %1224 = vmatpush1.msra.mxu0 0.0
    %1225 = vmatprep.subr.mxu0 0.0
    %1226 = vmatpush1.msra.mxu0 0.0
    %1227 = vmatprep.subr.mxu0 0.0
    %1228 = vmatpush1.msra.mxu0 0.0
    %1229 = vmatprep.subr.mxu0 0.0
    %1230 = vmatpush1.msra.mxu0 0.0
    %1231 = vmatprep.subr.mxu0 0.0
    %1232 = vmatpush1.msra.mxu0 0.0
    %1233 = vmatprep.subr.mxu0 0.0
    %1234 = vmatpush1.msra.mxu0 0.0
    %1235 = vmatprep.subr.mxu0 0.0
    %1236 = vmatpush1.msra.mxu0 0.0
    %1237 = vmatprep.mubr.f32.mxu0 0.0
    %1238 = vmatmul.mubr.f32.gmra.mrb[0].mxu0 %v1171
    %v1239 = vpop.f32.mrb[0].mxu0
    %v1240 = vadd.f32 0.0, %v1239
    %v1241 = vpop.f32.mrb[0].mxu0
    %1242 = vdwg.mxu0
    %v1243 = vadd.f32 %v1167, %v1240
    %v1244 = vxor.u32 %v1243, 2147483648
    %v1245 = vmul.f32 %v1244, 1.442695
    %v1246 = vpow.pop %v1245
    %v1247 = vadd.f32 %v1246, 1.0
    %v1248 = vrcp.pop %v1247
    %v1249 = vmul.f32 1.0, %v1248
    %v1250 = vadd.f32 %v1240, %v836
    %1252 = vrot.lane.b32.xlu0 %v1250, 64
    %v1253 = vpop.permute.xlu0 %1252
    %v1255 = vmul.f32 %v1249, %v1253
    %1257 = vrot.lane.b32.xlu0 %v1255, 64
    %v1258 = vpop.permute.xlu0 %1257
    %v1260 = vadd.f32 %v1167, %v1258
    %v1261 = vtanh.pop %v1260
    %v1262 = vsub.f32 1.0, %v1249
    %1264 = vrot.lane.b32.xlu0 %v1261, 96
    %v1265 = vpop.permute.xlu0 %1264
    %v1267 = vmul.f32 %v1262, %v1265
    %v1268 = vmul.f32 %v1249, %v1166
    %v1269 = vadd.f32 %v1267, %v1268
    %v1270 = vld [vmem:[#allocation2 + $0xa] sm:$0x3]
    %1272 = vrot.lane.b32.xlu0 %v1269, 96
    %v1273 = vpop.permute.xlu0 %1272
    %v1274 = vsel %vm749, %v1273, 0
    %1276 = vmatprep.subr.mxu0 0.0
    %1277 = vmatpush1.msra.mxu0 %v743
    %1278 = vmatprep.subr.mxu0 0.0
    %1279 = vmatpush1.msra.mxu0 %v744
    %1280 = vmatprep.subr.mxu0 0.0
    %1281 = vmatpush1.msra.mxu0 %v745
    %1282 = vmatprep.subr.mxu0 0.0
    %1283 = vmatpush1.msra.mxu0 %v746
    %1284 = vmatprep.subr.mxu0 0.0
    %1285 = vmatpush1.msra.mxu0 0.0
    %1286 = vmatprep.subr.mxu0 0.0
    %1287 = vmatpush1.msra.mxu0 0.0
    %1288 = vmatprep.subr.mxu0 0.0
    %1289 = vmatpush1.msra.mxu0 0.0
    %1290 = vmatprep.subr.mxu0 0.0
    %1291 = vmatpush1.msra.mxu0 0.0
    %1292 = vmatprep.subr.mxu0 0.0
    %1293 = vmatpush1.msra.mxu0 0.0
    %1294 = vmatprep.subr.mxu0 0.0
    %1295 = vmatpush1.msra.mxu0 0.0
    %1296 = vmatprep.subr.mxu0 0.0
    %1297 = vmatpush1.msra.mxu0 0.0
    %1298 = vmatprep.subr.mxu0 0.0
    %1299 = vmatpush1.msra.mxu0 0.0
    %1300 = vmatprep.subr.mxu0 0.0
    %1301 = vmatpush1.msra.mxu0 0.0
    %1302 = vmatprep.subr.mxu0 0.0
    %1303 = vmatpush1.msra.mxu0 0.0
    %1304 = vmatprep.subr.mxu0 0.0
    %1305 = vmatpush1.msra.mxu0 0.0
    %1306 = vmatprep.subr.mxu0 0.0
    %1307 = vmatpush1.msra.mxu0 0.0
    %1308 = vmatprep.subr.mxu0 0.0
    %1309 = vmatpush1.msra.mxu0 0.0
    %1310 = vmatprep.subr.mxu0 0.0
    %1311 = vmatpush1.msra.mxu0 0.0
    %1312 = vmatprep.subr.mxu0 0.0
    %1313 = vmatpush1.msra.mxu0 0.0
    %1314 = vmatprep.subr.mxu0 0.0
    %1315 = vmatpush1.msra.mxu0 0.0
    %1316 = vmatprep.subr.mxu0 0.0
    %1317 = vmatpush1.msra.mxu0 0.0
    %1318 = vmatprep.subr.mxu0 0.0
    %1319 = vmatpush1.msra.mxu0 0.0
    %1320 = vmatprep.subr.mxu0 0.0
    %1321 = vmatpush1.msra.mxu0 0.0
    %1322 = vmatprep.subr.mxu0 0.0
    %1323 = vmatpush1.msra.mxu0 0.0
    %1324 = vmatprep.subr.mxu0 0.0
    %1325 = vmatpush1.msra.mxu0 0.0
    %1326 = vmatprep.subr.mxu0 0.0
    %1327 = vmatpush1.msra.mxu0 0.0
    %1328 = vmatprep.subr.mxu0 0.0
    %1329 = vmatpush1.msra.mxu0 0.0
    %1330 = vmatprep.subr.mxu0 0.0
    %1331 = vmatpush1.msra.mxu0 0.0
    %1332 = vmatprep.subr.mxu0 0.0
    %1333 = vmatpush1.msra.mxu0 0.0
    %1334 = vmatprep.subr.mxu0 0.0
    %1335 = vmatpush1.msra.mxu0 0.0
    %1336 = vmatprep.subr.mxu0 0.0
    %1337 = vmatpush1.msra.mxu0 0.0
    %1338 = vmatprep.subr.mxu0 0.0
    %1339 = vmatpush1.msra.mxu0 0.0
    %1340 = vmatprep.mubr.f32.mxu0 0.0
    %1341 = vmatmul.mubr.f32.gmra.mrb[0].mxu0 %v1274
    %v1342 = vpop.f32.mrb[0].mxu0
    %v1343 = vadd.f32 0.0, %v1342
    %v1344 = vpop.f32.mrb[0].mxu0
    %1345 = vdwg.mxu0
    %v1346 = vadd.f32 %v1270, %v1343
    %v1347 = vxor.u32 %v1346, 2147483648
    %v1348 = vmul.f32 %v1347, 1.442695
    %v1349 = vpow.pop %v1348
    %v1350 = vadd.f32 %v1349, 1.0
    %v1351 = vrcp.pop %v1350
    %v1352 = vmul.f32 1.0, %v1351
    %v1353 = vadd.f32 %v1343, %v836
    %1355 = vrot.lane.b32.xlu0 %v1353, 64
    %v1356 = vpop.permute.xlu0 %1355
    %v1358 = vmul.f32 %v1352, %v1356
    %1360 = vrot.lane.b32.xlu0 %v1358, 64
    %v1361 = vpop.permute.xlu0 %1360
    %v1363 = vadd.f32 %v1270, %v1361
    %v1364 = vtanh.pop %v1363
    %v1365 = vsub.f32 1.0, %v1352
    %1367 = vrot.lane.b32.xlu0 %v1364, 96
    %v1368 = vpop.permute.xlu0 %1367
    %v1370 = vmul.f32 %v1365, %v1368
    %v1371 = vmul.f32 %v1352, %v1269
    %v1372 = vadd.f32 %v1370, %v1371
    %v1373 = vld [vmem:[#allocation2 + $0xc] sm:$0x3]
    %1375 = vrot.lane.b32.xlu0 %v1372, 96
    %v1376 = vpop.permute.xlu0 %1375
    %v1377 = vsel %vm749, %v1376, 0
    %1379 = vmatprep.subr.mxu0 0.0
    %1380 = vmatpush1.msra.mxu0 %v743
    %1381 = vmatprep.subr.mxu0 0.0
    %1382 = vmatpush1.msra.mxu0 %v744
    %1383 = vmatprep.subr.mxu0 0.0
    %1384 = vmatpush1.msra.mxu0 %v745
    %1385 = vmatprep.subr.mxu0 0.0
    %1386 = vmatpush1.msra.mxu0 %v746
    %1387 = vmatprep.subr.mxu0 0.0
    %1388 = vmatpush1.msra.mxu0 0.0
    %1389 = vmatprep.subr.mxu0 0.0
    %1390 = vmatpush1.msra.mxu0 0.0
    %1391 = vmatprep.subr.mxu0 0.0
    %1392 = vmatpush1.msra.mxu0 0.0
    %1393 = vmatprep.subr.mxu0 0.0
    %1394 = vmatpush1.msra.mxu0 0.0
    %1395 = vmatprep.subr.mxu0 0.0
    %1396 = vmatpush1.msra.mxu0 0.0
    %1397 = vmatprep.subr.mxu0 0.0
    %1398 = vmatpush1.msra.mxu0 0.0
    %1399 = vmatprep.subr.mxu0 0.0
    %1400 = vmatpush1.msra.mxu0 0.0
    %1401 = vmatprep.subr.mxu0 0.0
    %1402 = vmatpush1.msra.mxu0 0.0
    %1403 = vmatprep.subr.mxu0 0.0
    %1404 = vmatpush1.msra.mxu0 0.0
    %1405 = vmatprep.subr.mxu0 0.0
    %1406 = vmatpush1.msra.mxu0 0.0
    %1407 = vmatprep.subr.mxu0 0.0
    %1408 = vmatpush1.msra.mxu0 0.0
    %1409 = vmatprep.subr.mxu0 0.0
    %1410 = vmatpush1.msra.mxu0 0.0
    %1411 = vmatprep.subr.mxu0 0.0
    %1412 = vmatpush1.msra.mxu0 0.0
    %1413 = vmatprep.subr.mxu0 0.0
    %1414 = vmatpush1.msra.mxu0 0.0
    %1415 = vmatprep.subr.mxu0 0.0
    %1416 = vmatpush1.msra.mxu0 0.0
    %1417 = vmatprep.subr.mxu0 0.0
    %1418 = vmatpush1.msra.mxu0 0.0
    %1419 = vmatprep.subr.mxu0 0.0
    %1420 = vmatpush1.msra.mxu0 0.0
    %1421 = vmatprep.subr.mxu0 0.0
    %1422 = vmatpush1.msra.mxu0 0.0
    %1423 = vmatprep.subr.mxu0 0.0
    %1424 = vmatpush1.msra.mxu0 0.0
    %1425 = vmatprep.subr.mxu0 0.0
    %1426 = vmatpush1.msra.mxu0 0.0
    %1427 = vmatprep.subr.mxu0 0.0
    %1428 = vmatpush1.msra.mxu0 0.0
    %1429 = vmatprep.subr.mxu0 0.0
    %1430 = vmatpush1.msra.mxu0 0.0
    %1431 = vmatprep.subr.mxu0 0.0
    %1432 = vmatpush1.msra.mxu0 0.0
    %1433 = vmatprep.subr.mxu0 0.0
    %1434 = vmatpush1.msra.mxu0 0.0
    %1435 = vmatprep.subr.mxu0 0.0
    %1436 = vmatpush1.msra.mxu0 0.0
    %1437 = vmatprep.subr.mxu0 0.0
    %1438 = vmatpush1.msra.mxu0 0.0
    %1439 = vmatprep.subr.mxu0 0.0
    %1440 = vmatpush1.msra.mxu0 0.0
    %1441 = vmatprep.subr.mxu0 0.0
    %1442 = vmatpush1.msra.mxu0 0.0
    %1443 = vmatprep.mubr.f32.mxu0 0.0
    %1444 = vmatmul.mubr.f32.gmra.mrb[0].mxu0 %v1377
    %v1445 = vpop.f32.mrb[0].mxu0
    %v1446 = vadd.f32 0.0, %v1445
    %v1447 = vpop.f32.mrb[0].mxu0
    %1448 = vdwg.mxu0
    %v1449 = vadd.f32 %v1373, %v1446
    %v1450 = vxor.u32 %v1449, 2147483648
    %v1451 = vmul.f32 %v1450, 1.442695
    %v1452 = vpow.pop %v1451
    %v1453 = vadd.f32 %v1452, 1.0
    %v1454 = vrcp.pop %v1453
    %v1455 = vmul.f32 1.0, %v1454
    %v1456 = vadd.f32 %v1446, %v836
    %1458 = vrot.lane.b32.xlu0 %v1456, 64
    %v1459 = vpop.permute.xlu0 %1458
    %v1461 = vmul.f32 %v1455, %v1459
    %1463 = vrot.lane.b32.xlu0 %v1461, 64
    %v1464 = vpop.permute.xlu0 %1463
    %v1466 = vadd.f32 %v1373, %v1464
    %v1467 = vtanh.pop %v1466
    %v1468 = vsub.f32 1.0, %v1455
    %1470 = vrot.lane.b32.xlu0 %v1467, 96
    %v1471 = vpop.permute.xlu0 %1470
    %v1473 = vmul.f32 %v1468, %v1471
    %v1474 = vmul.f32 %v1455, %v1372
    %v1475 = vadd.f32 %v1473, %v1474
    %v1476 = vld [vmem:[#allocation2 + $0xe] sm:$0x3]
    %1478 = vrot.lane.b32.xlu0 %v1475, 96
    %v1479 = vpop.permute.xlu0 %1478
    %v1480 = vsel %vm749, %v1479, 0
    %1482 = vmatprep.subr.mxu0 0.0
    %1483 = vmatpush1.msra.mxu0 %v743
    %1484 = vmatprep.subr.mxu0 0.0
    %1485 = vmatpush1.msra.mxu0 %v744
    %1486 = vmatprep.subr.mxu0 0.0
    %1487 = vmatpush1.msra.mxu0 %v745
    %1488 = vmatprep.subr.mxu0 0.0
    %1489 = vmatpush1.msra.mxu0 %v746
    %1490 = vmatprep.subr.mxu0 0.0
    %1491 = vmatpush1.msra.mxu0 0.0
    %1492 = vmatprep.subr.mxu0 0.0
    %1493 = vmatpush1.msra.mxu0 0.0
    %1494 = vmatprep.subr.mxu0 0.0
    %1495 = vmatpush1.msra.mxu0 0.0
    %1496 = vmatprep.subr.mxu0 0.0
    %1497 = vmatpush1.msra.mxu0 0.0
    %1498 = vmatprep.subr.mxu0 0.0
    %1499 = vmatpush1.msra.mxu0 0.0
    %1500 = vmatprep.subr.mxu0 0.0
    %1501 = vmatpush1.msra.mxu0 0.0
    %1502 = vmatprep.subr.mxu0 0.0
    %1503 = vmatpush1.msra.mxu0 0.0
    %1504 = vmatprep.subr.mxu0 0.0
    %1505 = vmatpush1.msra.mxu0 0.0
    %1506 = vmatprep.subr.mxu0 0.0
    %1507 = vmatpush1.msra.mxu0 0.0
    %1508 = vmatprep.subr.mxu0 0.0
    %1509 = vmatpush1.msra.mxu0 0.0
    %1510 = vmatprep.subr.mxu0 0.0
    %1511 = vmatpush1.msra.mxu0 0.0
    %1512 = vmatprep.subr.mxu0 0.0
    %1513 = vmatpush1.msra.mxu0 0.0
    %1514 = vmatprep.subr.mxu0 0.0
    %1515 = vmatpush1.msra.mxu0 0.0
    %1516 = vmatprep.subr.mxu0 0.0
    %1517 = vmatpush1.msra.mxu0 0.0
    %1518 = vmatprep.subr.mxu0 0.0
    %1519 = vmatpush1.msra.mxu0 0.0
    %1520 = vmatprep.subr.mxu0 0.0
    %1521 = vmatpush1.msra.mxu0 0.0
    %1522 = vmatprep.subr.mxu0 0.0
    %1523 = vmatpush1.msra.mxu0 0.0
    %1524 = vmatprep.subr.mxu0 0.0
    %1525 = vmatpush1.msra.mxu0 0.0
    %1526 = vmatprep.subr.mxu0 0.0
    %1527 = vmatpush1.msra.mxu0 0.0
    %1528 = vmatprep.subr.mxu0 0.0
    %1529 = vmatpush1.msra.mxu0 0.0
    %1530 = vmatprep.subr.mxu0 0.0
    %1531 = vmatpush1.msra.mxu0 0.0
    %1532 = vmatprep.subr.mxu0 0.0
    %1533 = vmatpush1.msra.mxu0 0.0
    %1534 = vmatprep.subr.mxu0 0.0
    %1535 = vmatpush1.msra.mxu0 0.0
    %1536 = vmatprep.subr.mxu0 0.0
    %1537 = vmatpush1.msra.mxu0 0.0
    %1538 = vmatprep.subr.mxu0 0.0
    %1539 = vmatpush1.msra.mxu0 0.0
    %1540 = vmatprep.subr.mxu0 0.0
    %1541 = vmatpush1.msra.mxu0 0.0
    %1542 = vmatprep.subr.mxu0 0.0
    %1543 = vmatpush1.msra.mxu0 0.0
    %1544 = vmatprep.subr.mxu0 0.0
    %1545 = vmatpush1.msra.mxu0 0.0
    %1546 = vmatprep.mubr.f32.mxu0 0.0
    %1547 = vmatmul.mubr.f32.gmra.mrb[0].mxu0 %v1480
    %v1548 = vpop.f32.mrb[0].mxu0
    %v1549 = vadd.f32 0.0, %v1548
    %v1550 = vpop.f32.mrb[0].mxu0
    %1551 = vdwg.mxu0
    %v1552 = vadd.f32 %v1476, %v1549
    %v1553 = vxor.u32 %v1552, 2147483648
    %v1554 = vmul.f32 %v1553, 1.442695
    %v1555 = vpow.pop %v1554
    %v1556 = vadd.f32 %v1555, 1.0
    %v1557 = vrcp.pop %v1556
    %v1558 = vmul.f32 1.0, %v1557
    %v1559 = vadd.f32 %v1549, %v836
    %1561 = vrot.lane.b32.xlu0 %v1559, 64
    %v1562 = vpop.permute.xlu0 %1561
    %v1564 = vmul.f32 %v1558, %v1562
    %1566 = vrot.lane.b32.xlu0 %v1564, 64
    %v1567 = vpop.permute.xlu0 %1566
    %v1569 = vadd.f32 %v1476, %v1567
    %v1570 = vtanh.pop %v1569
    %v1571 = vsub.f32 1.0, %v1558
    %1573 = vrot.lane.b32.xlu0 %v1570, 96
    %v1574 = vpop.permute.xlu0 %1573
    %v1576 = vmul.f32 %v1571, %v1574
    %v1577 = vmul.f32 %v1558, %v1475
    %v1578 = vadd.f32 %v1576, %v1577
    %v1579 = vld [vmem:[%s12] sm:$0xff]
    %v1580 = vld [vmem:[%s12 + $0x8] sm:$0xff]
    %v1581 = vld [vmem:[%s12 + $0x10] sm:$0xff]
    %v1582 = vld [vmem:[%s12 + $0x18] sm:$0xff]
    %v1583 = vld [vmem:[%s13] sm:$0x1]
    %v1585 = vlaneseq
    %v1586 = vshrl.u32 %v1585, 7
    %v1587 = vsub.s32 0, %v1586
    %v1588 = vrot.slane %v1583, %v1587
    %1591 = vrot.lane.b32.xlu0 %v1578, 96
    %v1592 = vpop.permute.xlu0 %1591
    %v1593 = vsel %vm749, %v1592, 0
    %1595 = vmatprep.subr.mxu0 0.0
    %1596 = vmatpush1.msra.mxu0 %v1579
    %1597 = vmatprep.subr.mxu0 0.0
    %1598 = vmatpush1.msra.mxu0 %v1580
    %1599 = vmatprep.subr.mxu0 0.0
    %1600 = vmatpush1.msra.mxu0 %v1581
    %1601 = vmatprep.subr.mxu0 0.0
    %1602 = vmatpush1.msra.mxu0 %v1582
    %1603 = vmatprep.subr.mxu0 0.0
    %1604 = vmatpush1.msra.mxu0 0.0
    %1605 = vmatprep.subr.mxu0 0.0
    %1606 = vmatpush1.msra.mxu0 0.0
    %1607 = vmatprep.subr.mxu0 0.0
    %1608 = vmatpush1.msra.mxu0 0.0
    %1609 = vmatprep.subr.mxu0 0.0
    %1610 = vmatpush1.msra.mxu0 0.0
    %1611 = vmatprep.subr.mxu0 0.0
    %1612 = vmatpush1.msra.mxu0 0.0
    %1613 = vmatprep.subr.mxu0 0.0
    %1614 = vmatpush1.msra.mxu0 0.0
    %1615 = vmatprep.subr.mxu0 0.0
    %1616 = vmatpush1.msra.mxu0 0.0
    %1617 = vmatprep.subr.mxu0 0.0
    %1618 = vmatpush1.msra.mxu0 0.0
    %1619 = vmatprep.subr.mxu0 0.0
    %1620 = vmatpush1.msra.mxu0 0.0
    %1621 = vmatprep.subr.mxu0 0.0
    %1622 = vmatpush1.msra.mxu0 0.0
    %1623 = vmatprep.subr.mxu0 0.0
    %1624 = vmatpush1.msra.mxu0 0.0
    %1625 = vmatprep.subr.mxu0 0.0
    %1626 = vmatpush1.msra.mxu0 0.0
    %1627 = vmatprep.subr.mxu0 0.0
    %1628 = vmatpush1.msra.mxu0 0.0
    %1629 = vmatprep.subr.mxu0 0.0
    %1630 = vmatpush1.msra.mxu0 0.0
    %1631 = vmatprep.subr.mxu0 0.0
    %1632 = vmatpush1.msra.mxu0 0.0
    %1633 = vmatprep.subr.mxu0 0.0
    %1634 = vmatpush1.msra.mxu0 0.0
    %1635 = vmatprep.subr.mxu0 0.0
    %1636 = vmatpush1.msra.mxu0 0.0
    %1637 = vmatprep.subr.mxu0 0.0
    %1638 = vmatpush1.msra.mxu0 0.0
    %1639 = vmatprep.subr.mxu0 0.0
    %1640 = vmatpush1.msra.mxu0 0.0
    %1641 = vmatprep.subr.mxu0 0.0
    %1642 = vmatpush1.msra.mxu0 0.0
    %1643 = vmatprep.subr.mxu0 0.0
    %1644 = vmatpush1.msra.mxu0 0.0
    %1645 = vmatprep.subr.mxu0 0.0
    %1646 = vmatpush1.msra.mxu0 0.0
    %1647 = vmatprep.subr.mxu0 0.0
    %1648 = vmatpush1.msra.mxu0 0.0
    %1649 = vmatprep.subr.mxu0 0.0
    %1650 = vmatpush1.msra.mxu0 0.0
    %1651 = vmatprep.subr.mxu0 0.0
    %1652 = vmatpush1.msra.mxu0 0.0
    %1653 = vmatprep.subr.mxu0 0.0
    %1654 = vmatpush1.msra.mxu0 0.0
    %1655 = vmatprep.subr.mxu0 0.0
    %1656 = vmatpush1.msra.mxu0 0.0
    %1657 = vmatprep.subr.mxu0 0.0
    %1658 = vmatpush1.msra.mxu0 0.0
    %1659 = vmatprep.mubr.f32.mxu0 0.0
    %1660 = vmatmul.mubr.f32.gmra.mrb[0].mxu0 %v1593
    %v1661 = vpop.f32.mrb[0].mxu0
    %v1662 = vadd.f32 %v1588, %v1661
    %v1663 = vpop.f32.mrb[0].mxu0
    %1664 = vdwg.mxu0
    %v1665 = vld [vmem:[%s14] sm:$0x1]
    %v1666 = vld [vmem:[%s15] sm:$0x1]
    %vm1667 = vcmask 1041408
    %v1668 = vsel %vm1667, %v1662, 0.0
    %v1669 = vrot.slane %v1668, 4
    %v1670 = vadd.f32 %v1668, %v1669
    %v1671 = vrot.slane %v1670, 2
    %v1672 = vadd.f32 %v1670, %v1671
    %v1673 = vrot.slane %v1672, 1
    %v1674 = vadd.f32 %v1672, %v1673
    %v1675 = vrcp.pop 2.0
    %v1676 = vmul.f32 %v1674, %v1675
    %v1677 = vsub.f32 %v1662, %v1676
    %v1678 = vmul.f32 %v1677, %v1677
    %v1679 = vsel %vm1667, %v1678, 0.0
    %v1680 = vrot.slane %v1679, 4
    %v1681 = vadd.f32 %v1679, %v1680
    %v1682 = vrot.slane %v1681, 2
    %v1683 = vadd.f32 %v1681, %v1682
    %v1684 = vrot.slane %v1683, 1
    %v1685 = vadd.f32 %v1683, %v1684
    %v1686 = vmul.f32 %v1685, %v1675
    %v1687 = vadd.f32 %v1686, 1e-05
    %v1688 = vrsqrt.pop %v1687
    %v1689 = vmul.f32 %v1677, %v1688
    %v1691 = vlaneseq
    %v1692 = vshrl.u32 %v1691, 7
    %v1693 = vsub.s32 0, %v1692
    %v1694 = vrot.slane %v1665, %v1693
    %v1696 = vmul.f32 %v1689, %v1694
    %v1698 = vlaneseq
    %v1699 = vshrl.u32 %v1698, 7
    %v1700 = vsub.s32 0, %v1699
    %v1701 = vrot.slane %v1666, %v1700
    %v1703 = vadd.f32 %v1696, %v1701
    %v1704 = vld [vmem:[%s16] sm:$0xff]
    %v1705 = vld [vmem:[%s16 + $0x8] sm:$0xff]
    %v1706 = vld [vmem:[%s16 + $0x10] sm:$0xff]
    %v1707 = vld [vmem:[%s16 + $0x18] sm:$0xff]
    %v1708 = vld [vmem:[%s16 + $0x20] sm:$0xff]
    %v1709 = vld [vmem:[%s16 + $0x28] sm:$0xff]
    %v1710 = vld [vmem:[%s16 + $0x30] sm:$0xff]
    %v1711 = vld [vmem:[%s16 + $0x38] sm:$0xff]
    %v1712 = vld [vmem:[%s16 + $0x40] sm:$0xff]
    %v1713 = vld [vmem:[%s16 + $0x48] sm:$0xff]
    %v1714 = vld [vmem:[%s16 + $0x50] sm:$0xff]
    %v1715 = vld [vmem:[%s16 + $0x58] sm:$0xff]
    %v1716 = vld [vmem:[%s16 + $0x60] sm:$0xff]
    %v1717 = vld [vmem:[%s16 + $0x68] sm:$0xff]
    %v1718 = vld [vmem:[%s16 + $0x70] sm:$0xff]
    %v1719 = vld [vmem:[%s16 + $0x78] sm:$0xff]
    %v1720 = vld [vmem:[%s16 + $0x80] sm:$0xff]
    %v1721 = vld [vmem:[%s16 + $0x88] sm:$0xff]
    %v1722 = vld [vmem:[%s16 + $0x90] sm:$0xff]
    %v1723 = vld [vmem:[%s16 + $0x98] sm:$0xff]
    %v1724 = vld [vmem:[%s16 + $0xa0] sm:$0xff]
    %v1725 = vld [vmem:[%s16 + $0xa8] sm:$0xff]
    %v1726 = vld [vmem:[%s16 + $0xb0] sm:$0xff]
    %v1727 = vld [vmem:[%s16 + $0xb8] sm:$0xff]
    %v1728 = vld [vmem:[%s16 + $0xc0] sm:$0xff]
    %v1729 = vld [vmem:[%s16 + $0xc8] sm:$0xff]
    %v1730 = vld [vmem:[%s16 + $0xd0] sm:$0xff]
    %v1731 = vld [vmem:[%s16 + $0xd8] sm:$0xff]
    %v1732 = vld [vmem:[%s16 + $0xe0] sm:$0xff]
    %v1733 = vld [vmem:[%s16 + $0xe8] sm:$0xff]
    %v1734 = vld [vmem:[%s16 + $0xf0] sm:$0xff]
    %v1735 = vld [vmem:[%s16 + $0xf8] sm:$0xff]
    %v1736 = vld [vmem:[%s17] sm:$0x3]
    %v1738 = vlaneseq
    %v1739 = vshrl.u32 %v1738, 7
    %v1740 = vsub.s32 0, %v1739
    %v1741 = vrot.slane %v1736, %v1740
    %v1742 = vlaneseq
    %v1743 = vshrl.u32 %v1742, 7
    %v1744 = vsub.s32 1, %v1743
    %v1745 = vrot.slane %v1736, %v1744
    %1748 = vmatprep.subr.mxu0 %v1705
    %1749 = vmatpush1.msra.mxu0 %v1704
    %1750 = vmatprep.subr.mxu0 %v1707
    %1751 = vmatpush1.msra.mxu0 %v1706
    %1752 = vmatprep.subr.mxu0 %v1709
    %1753 = vmatpush1.msra.mxu0 %v1708
    %1754 = vmatprep.subr.mxu0 %v1711
    %1755 = vmatpush1.msra.mxu0 %v1710
    %1756 = vmatprep.subr.mxu0 %v1713
    %1757 = vmatpush1.msra.mxu0 %v1712
    %1758 = vmatprep.subr.mxu0 %v1715
    %1759 = vmatpush1.msra.mxu0 %v1714
    %1760 = vmatprep.subr.mxu0 %v1717
    %1761 = vmatpush1.msra.mxu0 %v1716
    %1762 = vmatprep.subr.mxu0 %v1719
    %1763 = vmatpush1.msra.mxu0 %v1718
    %1764 = vmatprep.subr.mxu0 %v1721
    %1765 = vmatpush1.msra.mxu0 %v1720
    %1766 = vmatprep.subr.mxu0 %v1723
    %1767 = vmatpush1.msra.mxu0 %v1722
    %1768 = vmatprep.subr.mxu0 %v1725
    %1769 = vmatpush1.msra.mxu0 %v1724
    %1770 = vmatprep.subr.mxu0 %v1727
    %1771 = vmatpush1.msra.mxu0 %v1726
    %1772 = vmatprep.subr.mxu0 %v1729
    %1773 = vmatpush1.msra.mxu0 %v1728
    %1774 = vmatprep.subr.mxu0 %v1731
    %1775 = vmatpush1.msra.mxu0 %v1730
    %1776 = vmatprep.subr.mxu0 %v1733
    %1777 = vmatpush1.msra.mxu0 %v1732
    %1778 = vmatprep.subr.mxu0 %v1735
    %1779 = vmatpush1.msra.mxu0 %v1734
    %1780 = vmatprep.subr.mxu0 0.0
    %1781 = vmatpush1.msra.mxu0 0.0
    %1782 = vmatprep.subr.mxu0 0.0
    %1783 = vmatpush1.msra.mxu0 0.0
    %1784 = vmatprep.subr.mxu0 0.0
    %1785 = vmatpush1.msra.mxu0 0.0
    %1786 = vmatprep.subr.mxu0 0.0
    %1787 = vmatpush1.msra.mxu0 0.0
    %1788 = vmatprep.subr.mxu0 0.0
    %1789 = vmatpush1.msra.mxu0 0.0
    %1790 = vmatprep.subr.mxu0 0.0
    %1791 = vmatpush1.msra.mxu0 0.0
    %1792 = vmatprep.subr.mxu0 0.0
    %1793 = vmatpush1.msra.mxu0 0.0
    %1794 = vmatprep.subr.mxu0 0.0
    %1795 = vmatpush1.msra.mxu0 0.0
    %1796 = vmatprep.subr.mxu0 0.0
    %1797 = vmatpush1.msra.mxu0 0.0
    %1798 = vmatprep.subr.mxu0 0.0
    %1799 = vmatpush1.msra.mxu0 0.0
    %1800 = vmatprep.subr.mxu0 0.0
    %1801 = vmatpush1.msra.mxu0 0.0
    %1802 = vmatprep.subr.mxu0 0.0
    %1803 = vmatpush1.msra.mxu0 0.0
    %1804 = vmatprep.subr.mxu0 0.0
    %1805 = vmatpush1.msra.mxu0 0.0
    %1806 = vmatprep.subr.mxu0 0.0
    %1807 = vmatpush1.msra.mxu0 0.0
    %1808 = vmatprep.subr.mxu0 0.0
    %1809 = vmatpush1.msra.mxu0 0.0
    %1810 = vmatprep.subr.mxu0 0.0
    %1811 = vmatpush1.msra.mxu0 0.0
    %1812 = vmatprep.mubr.f32.mxu0 0.0
    %1813 = vmatmul.mubr.f32.gmra.mrb[0].mxu0 %v1703
    %v1814 = vpop.f32.mrb[0].mxu0
    %v1815 = vadd.f32 %v1741, %v1814
    %v1816 = vpop.f32.mrb[0].mxu0
    %v1817 = vadd.f32 %v1745, %v1816
    %1818 = vdwg.mxu0
    %v1819 = vld [vmem:[%s18] sm:$0x3]
    %v1820 = vld [vmem:[%s19] sm:$0x3]
    %v1821 = vsel %vm1667, %v1815, 0.0
    %v1822 = vrot.slane %v1821, 4
    %v1823 = vadd.f32 %v1821, %v1822
    %v1824 = vrot.slane %v1823, 2
    %v1825 = vadd.f32 %v1823, %v1824
    %v1826 = vrot.slane %v1825, 1
    %v1827 = vadd.f32 %v1825, %v1826
    %v1828 = vsel %vm1667, %v1817, 0.0
    %v1829 = vrot.slane %v1828, 4
    %v1830 = vadd.f32 %v1828, %v1829
    %v1831 = vrot.slane %v1830, 2
    %v1832 = vadd.f32 %v1830, %v1831
    %v1833 = vrot.slane %v1832, 1
    %v1834 = vadd.f32 %v1832, %v1833
    %v1835 = vmul.f32 %v1827, %v1675
    %v1836 = vmul.f32 %v1834, %v1675
    %v1837 = vsub.f32 %v1815, %v1835
    %v1838 = vsub.f32 %v1817, %v1836
    %v1839 = vmul.f32 %v1837, %v1837
    %v1840 = vmul.f32 %v1838, %v1838
    %v1841 = vsel %vm1667, %v1839, 0.0
    %v1842 = vrot.slane %v1841, 4
    %v1843 = vadd.f32 %v1841, %v1842
    %v1844 = vrot.slane %v1843, 2
    %v1845 = vadd.f32 %v1843, %v1844
    %v1846 = vrot.slane %v1845, 1
    %v1847 = vadd.f32 %v1845, %v1846
    %v1848 = vsel %vm1667, %v1840, 0.0
    %v1849 = vrot.slane %v1848, 4
    %v1850 = vadd.f32 %v1848, %v1849
    %v1851 = vrot.slane %v1850, 2
    %v1852 = vadd.f32 %v1850, %v1851
    %v1853 = vrot.slane %v1852, 1
    %v1854 = vadd.f32 %v1852, %v1853
    %v1855 = vmul.f32 %v1847, %v1675
    %v1856 = vmul.f32 %v1854, %v1675
    %v1857 = vadd.f32 %v1855, 1e-05
    %v1858 = vadd.f32 %v1856, 1e-05
    %v1859 = vrsqrt.pop %v1857
    %v1860 = vrsqrt.pop %v1858
    %v1861 = vmul.f32 %v1837, %v1859
    %v1862 = vmul.f32 %v1838, %v1860
    %v1864 = vlaneseq
    %v1865 = vshrl.u32 %v1864, 7
    %v1866 = vsub.s32 0, %v1865
    %v1867 = vrot.slane %v1819, %v1866
    %v1868 = vlaneseq
    %v1869 = vshrl.u32 %v1868, 7
    %v1870 = vsub.s32 1, %v1869
    %v1871 = vrot.slane %v1819, %v1870
    %v1874 = vmul.f32 %v1861, %v1867
    %v1875 = vmul.f32 %v1862, %v1871
    %v1877 = vlaneseq
    %v1878 = vshrl.u32 %v1877, 7
    %v1879 = vsub.s32 0, %v1878
    %v1880 = vrot.slane %v1820, %v1879
    %v1881 = vlaneseq
    %v1882 = vshrl.u32 %v1881, 7
    %v1883 = vsub.s32 1, %v1882
    %v1884 = vrot.slane %v1820, %v1883
    %v1887 = vadd.f32 %v1874, %v1880
    %v1888 = vadd.f32 %v1875, %v1884
    %v1889 = vld [vmem:[%s20] sm:$0xff]
    %v1890 = vld [vmem:[%s20 + $0x8] sm:$0xff]
    %v1891 = vld [vmem:[%s20 + $0x10] sm:$0xff]
    %v1892 = vld [vmem:[%s20 + $0x18] sm:$0xff]
    %v1893 = vld [vmem:[%s20 + $0x20] sm:$0xff]
    %v1894 = vld [vmem:[%s20 + $0x28] sm:$0xff]
    %v1895 = vld [vmem:[%s20 + $0x30] sm:$0xff]
    %v1896 = vld [vmem:[%s20 + $0x38] sm:$0xff]
    %v1897 = vld [vmem:[%s20 + $0x40] sm:$0xff]
    %v1898 = vld [vmem:[%s20 + $0x48] sm:$0xff]
    %v1899 = vld [vmem:[%s20 + $0x50] sm:$0xff]
    %v1900 = vld [vmem:[%s20 + $0x58] sm:$0xff]
    %v1901 = vld [vmem:[%s20 + $0x60] sm:$0xff]
    %v1902 = vld [vmem:[%s20 + $0x68] sm:$0xff]
    %v1903 = vld [vmem:[%s20 + $0x70] sm:$0xff]
    %v1904 = vld [vmem:[%s20 + $0x78] sm:$0xff]
    %v1905 = vld [vmem:[%s20 + $0x80] sm:$0xff]
    %v1906 = vld [vmem:[%s20 + $0x88] sm:$0xff]
    %v1907 = vld [vmem:[%s20 + $0x90] sm:$0xff]
    %v1908 = vld [vmem:[%s20 + $0x98] sm:$0xff]
    %v1909 = vld [vmem:[%s20 + $0xa0] sm:$0xff]
    %v1910 = vld [vmem:[%s20 + $0xa8] sm:$0xff]
    %v1911 = vld [vmem:[%s20 + $0xb0] sm:$0xff]
    %v1912 = vld [vmem:[%s20 + $0xb8] sm:$0xff]
    %v1913 = vld [vmem:[%s20 + $0xc0] sm:$0xff]
    %v1914 = vld [vmem:[%s20 + $0xc8] sm:$0xff]
    %v1915 = vld [vmem:[%s20 + $0xd0] sm:$0xff]
    %v1916 = vld [vmem:[%s20 + $0xd8] sm:$0xff]
    %v1917 = vld [vmem:[%s20 + $0xe0] sm:$0xff]
    %v1918 = vld [vmem:[%s20 + $0xe8] sm:$0xff]
    %v1919 = vld [vmem:[%s20 + $0xf0] sm:$0xff]
    %v1920 = vld [vmem:[%s20 + $0xf8] sm:$0xff]
    %v1921 = vld [vmem:[%s21] sm:$0x1]
    %v1923 = vlaneseq
    %v1924 = vshrl.u32 %v1923, 7
    %v1925 = vsub.s32 0, %v1924
    %v1926 = vrot.slane %v1921, %v1925
    %1928 = vmatprep.subr.mxu0 0.0
    %1929 = vmatpush1.msra.mxu0 %v1889
    %1930 = vmatprep.subr.mxu0 0.0
    %1931 = vmatpush1.msra.mxu0 %v1890
    %1932 = vmatprep.subr.mxu0 0.0
    %1933 = vmatpush1.msra.mxu0 %v1891
    %1934 = vmatprep.subr.mxu0 0.0
    %1935 = vmatpush1.msra.mxu0 %v1892
    %1936 = vmatprep.subr.mxu0 0.0
    %1937 = vmatpush1.msra.mxu0 %v1893
    %1938 = vmatprep.subr.mxu0 0.0
    %1939 = vmatpush1.msra.mxu0 %v1894
    %1940 = vmatprep.subr.mxu0 0.0
    %1941 = vmatpush1.msra.mxu0 %v1895
    %1942 = vmatprep.subr.mxu0 0.0
    %1943 = vmatpush1.msra.mxu0 %v1896
    %1944 = vmatprep.subr.mxu0 0.0
    %1945 = vmatpush1.msra.mxu0 %v1897
    %1946 = vmatprep.subr.mxu0 0.0
    %1947 = vmatpush1.msra.mxu0 %v1898
    %1948 = vmatprep.subr.mxu0 0.0
    %1949 = vmatpush1.msra.mxu0 %v1899
    %1950 = vmatprep.subr.mxu0 0.0
    %1951 = vmatpush1.msra.mxu0 %v1900
    %1952 = vmatprep.subr.mxu0 0.0
    %1953 = vmatpush1.msra.mxu0 %v1901
    %1954 = vmatprep.subr.mxu0 0.0
    %1955 = vmatpush1.msra.mxu0 %v1902
    %1956 = vmatprep.subr.mxu0 0.0
    %1957 = vmatpush1.msra.mxu0 %v1903
    %1958 = vmatprep.subr.mxu0 0.0
    %1959 = vmatpush1.msra.mxu0 %v1904
    %1960 = vmatprep.subr.mxu0 0.0
    %1961 = vmatpush1.msra.mxu0 %v1905
    %1962 = vmatprep.subr.mxu0 0.0
    %1963 = vmatpush1.msra.mxu0 %v1906
    %1964 = vmatprep.subr.mxu0 0.0
    %1965 = vmatpush1.msra.mxu0 %v1907
    %1966 = vmatprep.subr.mxu0 0.0
    %1967 = vmatpush1.msra.mxu0 %v1908
    %1968 = vmatprep.subr.mxu0 0.0
    %1969 = vmatpush1.msra.mxu0 %v1909
    %1970 = vmatprep.subr.mxu0 0.0
    %1971 = vmatpush1.msra.mxu0 %v1910
    %1972 = vmatprep.subr.mxu0 0.0
    %1973 = vmatpush1.msra.mxu0 %v1911
    %1974 = vmatprep.subr.mxu0 0.0
    %1975 = vmatpush1.msra.mxu0 %v1912
    %1976 = vmatprep.subr.mxu0 0.0
    %1977 = vmatpush1.msra.mxu0 %v1913
    %1978 = vmatprep.subr.mxu0 0.0
    %1979 = vmatpush1.msra.mxu0 %v1914
    %1980 = vmatprep.subr.mxu0 0.0
    %1981 = vmatpush1.msra.mxu0 %v1915
    %1982 = vmatprep.subr.mxu0 0.0
    %1983 = vmatpush1.msra.mxu0 %v1916
    %1984 = vmatprep.subr.mxu0 0.0
    %1985 = vmatpush1.msra.mxu0 %v1917
    %1986 = vmatprep.subr.mxu0 0.0
    %1987 = vmatpush1.msra.mxu0 %v1918
    %1988 = vmatprep.subr.mxu0 0.0
    %1989 = vmatpush1.msra.mxu0 %v1919
    %1990 = vmatprep.subr.mxu0 0.0
    %1991 = vmatpush1.msra.mxu0 %v1920
    %1992 = vmatprep.mubr.f32.mxu0 %v1888
    %1993 = vmatmul.mubr.f32.gmra.mrb[0].mxu0 %v1887
    %v1994 = vpop.f32.mrb[0].mxu0
    %v1995 = vadd.f32 %v1926, %v1994
    %v1996 = vpop.f32.mrb[0].mxu0
    %1997 = vdwg.mxu0
    %vm1998 = vcmask 17408
    %1999 = vst.msk [vmem:[#allocation4] sm:$0x3] %vm1998, %v1995
    // Predicated region
    $region90: #{tpu_custom_call.1} parent=1 // pred_check
      _
    $region91: #{tpu_custom_call.1} parent=1 // pred_check_branch
      %2001 = sbr.rel (0) target = $region93
    $region92: #{tpu_custom_call.1} parent=1 // pred_region
      %s2003 = ssub.s32 32, 32
      %2004 = vsyncadd [#allocation5], %s2003
      %s2006 = sshll.u32 [#allocation4], 4
      %s2007 = int_to_ptr.vmem [resolvable:$true] %s2006
      %2009 = dma.vmem_to_hbm [thread:$0]  %s2007, 32, %s22, [#allocation5]
    $region93: #{tpu_custom_call.1} parent=1 // pred_fallthru
      _
    // Predicated region
    $region94: #{tpu_custom_call.1} parent=1 // pred_check
      _
    $region95: #{tpu_custom_call.1} parent=1 // pred_check_branch
      %2011 = sbr.rel (0) target = $region97
    $region96: #{tpu_custom_call.1} parent=1 // pred_region
      %2012 = dma.done [#allocation5], 32
    $region97: #{tpu_custom_call.1} parent=1 // pred_fallthru
      _
    %2013 = vsyncpa [#allocation5], 1

</llo_original>
